<compile_context>
chip_gen: v6e
topology: v6e:2x2x1
jax: 0.10.0
libtpu: 0.0.40
codegen_flags: <defaults>
</compile_context>

<pallas_src>
import math

import jax
import jax.numpy as jnp
from jax import lax
from jax.experimental import pallas as pl
from jax.experimental.pallas import tpu as pltpu


def _fused_tri_mul_kernel(z_ref, m_ref, w_ref, bias_ref, o_ref, ab_sc):
    # z_ref    : [N*N, Cz]        pair representation, row index = i*N + k
    # m_ref    : [1, N*N]         mask, broadcast over the channel (sublane) dim
    # w_ref    : [4*tile_c, Cz]   stacked (ag, bg, ap, bp) weights of this chunk
    # bias_ref : [4*tile_c, 1]    stacked biases (same order)
    # o_ref    : [tile_c, N, N]   p[c, i, j] = sum_k a[i,k,c] * b[j,k,c]
    # ab_sc    : [2*tile_c, N, N] bf16 VMEM scratch: rows [:tile_c]=a, [tile_c:]=b
    tile_c, N, _ = o_ref.shape

    z = z_ref[...]                    # [NN, Cz] f32
    m = m_ref[...]                    # [1, NN]
    w = w_ref[...]                    # [4*tile_c, Cz]
    bias = bias_ref[...]              # [4*tile_c, 1]

    # One MXU push for all four linear projections of this chunk:
    #   proj[h, r] = sum_q w[h, q] * z[r, q]     (contract on Cz, no transpose)
    proj = lax.dot_general(w, z, (((1,), (1,)), ((), ())),
                           preferred_element_type=jnp.float32) + bias

    gates = proj[:2 * tile_c]         # (ag ; bg)   [2*tile_c, NN]
    vals = proj[2 * tile_c:]          # (ap ; bp)   [2*tile_c, NN]

    # Full-lane VPU gating for a and b at once; EUP handles the sigmoid.
    ab = (m * jax.nn.sigmoid(gates) * vals).astype(ab_sc.dtype)   # [2*tile_c, NN]

    # On-chip relayout [2*tile_c, N*N] -> [2*tile_c, N, N] via static row-slab
    # stores (stays in VMEM; no HBM round trip for the intermediates).
    for r in range(N):
        ab_sc[:, r, :] = ab[:, r * N:(r + 1) * N]

    ab3 = ab_sc[...]                  # [2*tile_c, N, N] bf16
    a3 = ab3[:tile_c]
    b3 = ab3[tile_c:]

    # Batched triangle matmul over the tile_c channels: bf16 in, f32 accum.
    p = jnp.einsum('cik,cjk->cij', a3, b3,
                   preferred_element_type=jnp.float32)
    o_ref[...] = p.astype(o_ref.dtype)


def _choose_tile_c(C, N):
    """Channel tile: multiple of 8, <=128, VMEM-aware, >=2 grid steps if possible."""
    c8 = ((C + 7) // 8) * 8
    # rough per-channel VMEM use: bf16 ab scratch + double-buffered f32 out
    # + f32 projection / gating temporaries.
    per_c_bytes = (2 * 2 + 2 * 4 + 4 * 4) * N * N
    budget = 24 * 1024 * 1024
    cap = max(8, (budget // per_c_bytes) // 8 * 8)
    tile_c = int(min(128, c8, cap))
    if c8 // tile_c < 2 and c8 >= 16:          # keep >=2 steps for megacore
        tile_c = max(8, ((c8 // 2) // 8) * 8)
    c_pad = ((c8 + tile_c - 1) // tile_c) * tile_c
    return tile_c, c_pad


def triangle_mul_pallas(z, mask, w_ag, b_ag, w_ap, b_ap,
                        w_bg, b_bg, w_bp, b_bp, chunk_size: int):
    # `chunk_size` only controls how the PyTorch module partitions the hidden
    # dim (a host-memory optimization); the concatenated result equals the
    # unchunked math, so the TPU channel tile is chosen independently.
    del chunk_size
    N1, N2, Cz = z.shape
    assert N1 == N2, "triangle update expects a square pair representation"
    N = N1
    NN = N * N
    C = w_ag.shape[0]

    tile_c, C_pad = _choose_tile_c(C, N)
    num_chunks = C_pad // tile_c
    pad = C_pad - C

    def pad_rows(x):
        return jnp.pad(x, ((0, pad),) + ((0, 0),) * (x.ndim - 1))

    # Stack (ag, bg, ap, bp) and interleave per chunk so each grid step reads
    # one contiguous [4*tile_c, Cz] slab (single fused projection matmul) and
    # the kernel can gate a/b together as [2*tile_c, NN].
    w4 = jnp.stack([pad_rows(w).astype(jnp.float32)
                    for w in (w_ag, w_bg, w_ap, w_bp)], axis=0)        # [4, C_pad, Cz]
    w4 = w4.reshape(4, num_chunks, tile_c, Cz).transpose(1, 0, 2, 3)
    w4 = w4.reshape(num_chunks * 4 * tile_c, Cz)

    b4 = jnp.stack([pad_rows(b).astype(jnp.float32)
                    for b in (b_ag, b_bg, b_ap, b_bp)], axis=0)        # [4, C_pad]
    b4 = b4.reshape(4, num_chunks, tile_c, 1).transpose(1, 0, 2, 3)
    b4 = b4.reshape(num_chunks * 4 * tile_c, 1)

    z_flat = z.reshape(NN, Cz).astype(jnp.float32)    # free reshape, no transpose
    m_flat = mask.reshape(1, NN).astype(jnp.float32)

    # Raise the scoped-VMEM limit only if the working set actually needs it.
    est_vmem = (2 * NN * Cz * 4            # z (worst case double-buffered)
                + 2 * NN * 4               # mask
                + 2 * 4 * tile_c * (Cz + 1) * 4
                + 2 * tile_c * NN * 4      # output double buffer
                + 2 * tile_c * NN * 2      # combined a/b bf16 scratch
                + 6 * tile_c * NN * 4)     # in-kernel f32 temporaries headroom
    vmem_kwargs = {}
    if est_vmem > 32 * 1024 * 1024:
        vmem_kwargs["vmem_limit_bytes"] = int(min(est_vmem, 112 * 1024 * 1024))

    p = pl.pallas_call(
        _fused_tri_mul_kernel,
        out_shape=jax.ShapeDtypeStruct((C_pad, N, N), jnp.float32),
        grid_spec=pltpu.PrefetchScalarGridSpec(
            num_scalar_prefetch=0,
            grid=(num_chunks,),
            in_specs=[
                pl.BlockSpec((NN, Cz), lambda c: (0, 0)),           # z (grid-invariant)
                pl.BlockSpec((1, NN), lambda c: (0, 0)),            # mask (invariant)
                pl.BlockSpec((4 * tile_c, Cz), lambda c: (c, 0)),   # stacked weights
                pl.BlockSpec((4 * tile_c, 1), lambda c: (c, 0)),    # stacked biases
            ],
            out_specs=pl.BlockSpec((tile_c, N, N), lambda c: (c, 0, 0)),
            scratch_shapes=[pltpu.VMEM((2 * tile_c, N, N), jnp.bfloat16)],
        ),
        compiler_params=pltpu.CompilerParams(
            dimension_semantics=("parallel",), **vmem_kwargs),
    )(z_flat, m_flat, w4, b4)

    return p[:C]   # drop channel padding (== torch.cat(chunk_outputs, 0))


def _reference(z, mask, w_ag, b_ag, w_ap, b_ap, w_bg, b_bg, w_bp, b_bp):
    lin = lambda w, b: z @ w.T + b
    a = mask * jax.nn.sigmoid(lin(w_ag, b_ag)) * lin(w_ap, b_ap)
    b2 = mask * jax.nn.sigmoid(lin(w_bg, b_bg)) * lin(w_bp, b_bp)
    return jnp.einsum('ikc,jkc->cij', a, b2)


if __name__ == "__main__":
    N, C_z, C_hidden, chunk_size = 16, 32, 12, 8

    key = jax.random.PRNGKey(0)
    keys = jax.random.split(key, 10)

    z = jax.random.normal(keys[0], (N, N, C_z), dtype=jnp.float32)
    mask = (jax.random.uniform(keys[1], (N, N, 1)) > 0.1).astype(jnp.float32)

    scale = 1.0 / math.sqrt(C_z)
    w_ag = jax.random.normal(keys[2], (C_hidden, C_z), jnp.float32) * scale
    w_ap = jax.random.normal(keys[3], (C_hidden, C_z), jnp.float32) * scale
    w_bg = jax.random.normal(keys[4], (C_hidden, C_z), jnp.float32) * scale
    w_bp = jax.random.normal(keys[5], (C_hidden, C_z), jnp.float32) * scale
    b_ag = jax.random.normal(keys[6], (C_hidden,), jnp.float32) * 0.1
    b_ap = jax.random.normal(keys[7], (C_hidden,), jnp.float32) * 0.1
    b_bg = jax.random.normal(keys[8], (C_hidden,), jnp.float32) * 0.1
    b_bp = jax.random.normal(keys[9], (C_hidden,), jnp.float32) * 0.1

    out = triangle_mul_pallas(z, mask, w_ag, b_ag, w_ap, b_ap,
                              w_bg, b_bg, w_bp, b_bp, chunk_size)
    out = jax.block_until_ready(out)

    ref = _reference(z, mask, w_ag, b_ag, w_ap, b_ap, w_bg, b_bg, w_bp, b_bp)

    assert out.shape == (C_hidden, N, N), out.shape
    # bf16 matmul inputs (f32 accumulation) -> loosened tolerance.
    max_err = float(jnp.max(jnp.abs(out - ref)))
    assert jnp.allclose(out, ref, rtol=3e-2, atol=5e-2), max_err
    print("KERNEL_OK")
</pallas_src>

<mosaic_0001>
module attributes {stable_mosaic.version = 11 : i64} {
  func.func @_fused_tri_mul_kernel(%arg0: i32, %arg1: memref<256x32xf32, #tpu.memory_space<vmem>>, %arg2: memref<1x256xf32, #tpu.memory_space<vmem>>, %arg3: memref<32x32xf32, #tpu.memory_space<vmem>>, %arg4: memref<32x1xf32, #tpu.memory_space<vmem>>, %arg5: memref<8x16x16xf32, #tpu.memory_space<vmem>>, %arg6: memref<16x16x16xbf16, #tpu.memory_space<vmem>>) attributes {dimension_semantics = [#tpu.dimension_semantics<parallel>], iteration_bounds = array<i64: 2>, scalar_prefetch = 0 : i64, scratch_operands = 1 : i64, tpu.core_type = #tpu.core_type<tc>, window_params = [{pipeline_mode = #tpu.pipeline_mode<synchronous>, transform_indices = @transform_0, window_bounds = array<i64: 256, 32>}, {pipeline_mode = #tpu.pipeline_mode<synchronous>, transform_indices = @transform_1, window_bounds = array<i64: 1, 256>}, {transform_indices = @transform_2, window_bounds = array<i64: 32, 32>}, {transform_indices = @transform_3, window_bounds = array<i64: 32, 1>}, {transform_indices = @transform_4, window_bounds = array<i64: 8, 16, 16>}]} {
    %c0 = arith.constant 0 : index
    %c0_0 = arith.constant 0 : index
    %0 = vector.load %arg1[%c0, %c0_0] : memref<256x32xf32, #tpu.memory_space<vmem>>, vector<256x32xf32>
    %c0_1 = arith.constant 0 : index
    %c0_2 = arith.constant 0 : index
    %1 = vector.load %arg2[%c0_1, %c0_2] : memref<1x256xf32, #tpu.memory_space<vmem>>, vector<1x256xf32>
    %c0_3 = arith.constant 0 : index
    %c0_4 = arith.constant 0 : index
    %2 = vector.load %arg3[%c0_3, %c0_4] : memref<32x32xf32, #tpu.memory_space<vmem>>, vector<32x32xf32>
    %c0_5 = arith.constant 0 : index
    %c0_6 = arith.constant 0 : index
    %3 = vector.load %arg4[%c0_5, %c0_6] : memref<32x1xf32, #tpu.memory_space<vmem>>, vector<32x1xf32>
    %cst = arith.constant dense<0.000000e+00> : vector<32x256xf32>
    %4 = tpu.matmul %2, %0, %cst {dimension_numbers = #tpu.dot_dimension_numbers<[1], [1], [0], [0], [0, 0, 1, 0], [], []>} : vector<32x32xf32>, vector<256x32xf32>, vector<32x256xf32> -> vector<32x256xf32>
    %5 = vector.broadcast %3 : vector<32x1xf32> to vector<32x256xf32>
    %6 = arith.addf %4, %5 : vector<32x256xf32>
    %7 = vector.extract_strided_slice %6 {offsets = [0, 0], sizes = [16, 256], strides = [1, 1]} : vector<32x256xf32> to vector<16x256xf32>
    %8 = vector.extract_strided_slice %6 {offsets = [16, 0], sizes = [16, 256], strides = [1, 1]} : vector<32x256xf32> to vector<16x256xf32>
    %9 = arith.negf %7 : vector<16x256xf32>
    %10 = math.exp %9 : vector<16x256xf32>
    %cst_7 = arith.constant 1.000000e+00 : f32
    %11 = vector.broadcast %cst_7 : f32 to vector<16x256xf32>
    %12 = arith.addf %11, %10 : vector<16x256xf32>
    %13 = arith.divf %11, %12 : vector<16x256xf32>
    %14 = vector.broadcast %1 : vector<1x256xf32> to vector<16x256xf32>
    %15 = arith.mulf %14, %13 : vector<16x256xf32>
    %16 = arith.mulf %15, %8 : vector<16x256xf32>
    %17 = arith.truncf %16 : vector<16x256xf32> to vector<16x256xbf16>
    %18 = vector.extract_strided_slice %17 {offsets = [0, 0], sizes = [16, 16], strides = [1, 1]} : vector<16x256xbf16> to vector<16x16xbf16>
    %c0_8 = arith.constant 0 : index
    %c0_9 = arith.constant 0 : index
    %c0_10 = arith.constant 0 : index
    %19 = vector.load %arg6[%c0_8, %c0_9, %c0_10] : memref<16x16x16xbf16, #tpu.memory_space<vmem>>, vector<16x1x16xbf16>
    %20 = vector.shape_cast %19 : vector<16x1x16xbf16> to vector<16x16xbf16>
    %21 = vector.shape_cast %18 : vector<16x16xbf16> to vector<16x1x16xbf16>
    tpu.vector_store %arg6[%c0_8, %c0_9, %c0_10], %21 {strides = array<i32>} : memref<16x16x16xbf16, #tpu.memory_space<vmem>>, vector<16x1x16xbf16>,
    %22 = vector.extract_strided_slice %17 {offsets = [0, 16], sizes = [16, 16], strides = [1, 1]} : vector<16x256xbf16> to vector<16x16xbf16>
    %c0_11 = arith.constant 0 : index
    %c1 = arith.constant 1 : index
    %c0_12 = arith.constant 0 : index
    %23 = vector.load %arg6[%c0_11, %c1, %c0_12] : memref<16x16x16xbf16, #tpu.memory_space<vmem>>, vector<16x1x16xbf16>
    %24 = vector.shape_cast %23 : vector<16x1x16xbf16> to vector<16x16xbf16>
    %25 = vector.shape_cast %22 : vector<16x16xbf16> to vector<16x1x16xbf16>
    tpu.vector_store %arg6[%c0_11, %c1, %c0_12], %25 {strides = array<i32>} : memref<16x16x16xbf16, #tpu.memory_space<vmem>>, vector<16x1x16xbf16>,
    %26 = vector.extract_strided_slice %17 {offsets = [0, 32], sizes = [16, 16], strides = [1, 1]} : vector<16x256xbf16> to vector<16x16xbf16>
    %c0_13 = arith.constant 0 : index
    %c2 = arith.constant 2 : index
    %c0_14 = arith.constant 0 : index
    %27 = vector.load %arg6[%c0_13, %c2, %c0_14] : memref<16x16x16xbf16, #tpu.memory_space<vmem>>, vector<16x1x16xbf16>
    %28 = vector.shape_cast %27 : vector<16x1x16xbf16> to vector<16x16xbf16>
    %29 = vector.shape_cast %26 : vector<16x16xbf16> to vector<16x1x16xbf16>
    tpu.vector_store %arg6[%c0_13, %c2, %c0_14], %29 {strides = array<i32>} : memref<16x16x16xbf16, #tpu.memory_space<vmem>>, vector<16x1x16xbf16>,
    %30 = vector.extract_strided_slice %17 {offsets = [0, 48], sizes = [16, 16], strides = [1, 1]} : vector<16x256xbf16> to vector<16x16xbf16>
    %c0_15 = arith.constant 0 : index
    %c3 = arith.constant 3 : index
    %c0_16 = arith.constant 0 : index
    %31 = vector.load %arg6[%c0_15, %c3, %c0_16] : memref<16x16x16xbf16, #tpu.memory_space<vmem>>, vector<16x1x16xbf16>
    %32 = vector.shape_cast %31 : vector<16x1x16xbf16> to vector<16x16xbf16>
    %33 = vector.shape_cast %30 : vector<16x16xbf16> to vector<16x1x16xbf16>
    tpu.vector_store %arg6[%c0_15, %c3, %c0_16], %33 {strides = array<i32>} : memref<16x16x16xbf16, #tpu.memory_space<vmem>>, vector<16x1x16xbf16>,
    %34 = vector.extract_strided_slice %17 {offsets = [0, 64], sizes = [16, 16], strides = [1, 1]} : vector<16x256xbf16> to vector<16x16xbf16>
    %c0_17 = arith.constant 0 : index
    %c4 = arith.constant 4 : index
    %c0_18 = arith.constant 0 : index
    %35 = vector.load %arg6[%c0_17, %c4, %c0_18] : memref<16x16x16xbf16, #tpu.memory_space<vmem>>, vector<16x1x16xbf16>
    %36 = vector.shape_cast %35 : vector<16x1x16xbf16> to vector<16x16xbf16>
    %37 = vector.shape_cast %34 : vector<16x16xbf16> to vector<16x1x16xbf16>
    tpu.vector_store %arg6[%c0_17, %c4, %c0_18], %37 {strides = array<i32>} : memref<16x16x16xbf16, #tpu.memory_space<vmem>>, vector<16x1x16xbf16>,
    %38 = vector.extract_strided_slice %17 {offsets = [0, 80], sizes = [16, 16], strides = [1, 1]} : vector<16x256xbf16> to vector<16x16xbf16>
    %c0_19 = arith.constant 0 : index
    %c5 = arith.constant 5 : index
    %c0_20 = arith.constant 0 : index
    %39 = vector.load %arg6[%c0_19, %c5, %c0_20] : memref<16x16x16xbf16, #tpu.memory_space<vmem>>, vector<16x1x16xbf16>
    %40 = vector.shape_cast %39 : vector<16x1x16xbf16> to vector<16x16xbf16>
    %41 = vector.shape_cast %38 : vector<16x16xbf16> to vector<16x1x16xbf16>
    tpu.vector_store %arg6[%c0_19, %c5, %c0_20], %41 {strides = array<i32>} : memref<16x16x16xbf16, #tpu.memory_space<vmem>>, vector<16x1x16xbf16>,
    %42 = vector.extract_strided_slice %17 {offsets = [0, 96], sizes = [16, 16], strides = [1, 1]} : vector<16x256xbf16> to vector<16x16xbf16>
    %c0_21 = arith.constant 0 : index
    %c6 = arith.constant 6 : index
    %c0_22 = arith.constant 0 : index
    %43 = vector.load %arg6[%c0_21, %c6, %c0_22] : memref<16x16x16xbf16, #tpu.memory_space<vmem>>, vector<16x1x16xbf16>
    %44 = vector.shape_cast %43 : vector<16x1x16xbf16> to vector<16x16xbf16>
    %45 = vector.shape_cast %42 : vector<16x16xbf16> to vector<16x1x16xbf16>
    tpu.vector_store %arg6[%c0_21, %c6, %c0_22], %45 {strides = array<i32>} : memref<16x16x16xbf16, #tpu.memory_space<vmem>>, vector<16x1x16xbf16>,
    %46 = vector.extract_strided_slice %17 {offsets = [0, 112], sizes = [16, 16], strides = [1, 1]} : vector<16x256xbf16> to vector<16x16xbf16>
    %c0_23 = arith.constant 0 : index
    %c7 = arith.constant 7 : index
    %c0_24 = arith.constant 0 : index
    %47 = vector.load %arg6[%c0_23, %c7, %c0_24] : memref<16x16x16xbf16, #tpu.memory_space<vmem>>, vector<16x1x16xbf16>
    %48 = vector.shape_cast %47 : vector<16x1x16xbf16> to vector<16x16xbf16>
    %49 = vector.shape_cast %46 : vector<16x16xbf16> to vector<16x1x16xbf16>
    tpu.vector_store %arg6[%c0_23, %c7, %c0_24], %49 {strides = array<i32>} : memref<16x16x16xbf16, #tpu.memory_space<vmem>>, vector<16x1x16xbf16>,
    %50 = vector.extract_strided_slice %17 {offsets = [0, 128], sizes = [16, 16], strides = [1, 1]} : vector<16x256xbf16> to vector<16x16xbf16>
    %c0_25 = arith.constant 0 : index
    %c8 = arith.constant 8 : index
    %c0_26 = arith.constant 0 : index
    %51 = vector.load %arg6[%c0_25, %c8, %c0_26] : memref<16x16x16xbf16, #tpu.memory_space<vmem>>, vector<16x1x16xbf16>
    %52 = vector.shape_cast %51 : vector<16x1x16xbf16> to vector<16x16xbf16>
    %53 = vector.shape_cast %50 : vector<16x16xbf16> to vector<16x1x16xbf16>
    tpu.vector_store %arg6[%c0_25, %c8, %c0_26], %53 {strides = array<i32>} : memref<16x16x16xbf16, #tpu.memory_space<vmem>>, vector<16x1x16xbf16>,
    %54 = vector.extract_strided_slice %17 {offsets = [0, 144], sizes = [16, 16], strides = [1, 1]} : vector<16x256xbf16> to vector<16x16xbf16>
    %c0_27 = arith.constant 0 : index
    %c9 = arith.constant 9 : index
    %c0_28 = arith.constant 0 : index
    %55 = vector.load %arg6[%c0_27, %c9, %c0_28] : memref<16x16x16xbf16, #tpu.memory_space<vmem>>, vector<16x1x16xbf16>
    %56 = vector.shape_cast %55 : vector<16x1x16xbf16> to vector<16x16xbf16>
    %57 = vector.shape_cast %54 : vector<16x16xbf16> to vector<16x1x16xbf16>
    tpu.vector_store %arg6[%c0_27, %c9, %c0_28], %57 {strides = array<i32>} : memref<16x16x16xbf16, #tpu.memory_space<vmem>>, vector<16x1x16xbf16>,
    %58 = vector.extract_strided_slice %17 {offsets = [0, 160], sizes = [16, 16], strides = [1, 1]} : vector<16x256xbf16> to vector<16x16xbf16>
    %c0_29 = arith.constant 0 : index
    %c10 = arith.constant 10 : index
    %c0_30 = arith.constant 0 : index
    %59 = vector.load %arg6[%c0_29, %c10, %c0_30] : memref<16x16x16xbf16, #tpu.memory_space<vmem>>, vector<16x1x16xbf16>
    %60 = vector.shape_cast %59 : vector<16x1x16xbf16> to vector<16x16xbf16>
    %61 = vector.shape_cast %58 : vector<16x16xbf16> to vector<16x1x16xbf16>
    tpu.vector_store %arg6[%c0_29, %c10, %c0_30], %61 {strides = array<i32>} : memref<16x16x16xbf16, #tpu.memory_space<vmem>>, vector<16x1x16xbf16>,
    %62 = vector.extract_strided_slice %17 {offsets = [0, 176], sizes = [16, 16], strides = [1, 1]} : vector<16x256xbf16> to vector<16x16xbf16>
    %c0_31 = arith.constant 0 : index
    %c11 = arith.constant 11 : index
    %c0_32 = arith.constant 0 : index
    %63 = vector.load %arg6[%c0_31, %c11, %c0_32] : memref<16x16x16xbf16, #tpu.memory_space<vmem>>, vector<16x1x16xbf16>
    %64 = vector.shape_cast %63 : vector<16x1x16xbf16> to vector<16x16xbf16>
    %65 = vector.shape_cast %62 : vector<16x16xbf16> to vector<16x1x16xbf16>
    tpu.vector_store %arg6[%c0_31, %c11, %c0_32], %65 {strides = array<i32>} : memref<16x16x16xbf16, #tpu.memory_space<vmem>>, vector<16x1x16xbf16>,
    %66 = vector.extract_strided_slice %17 {offsets = [0, 192], sizes = [16, 16], strides = [1, 1]} : vector<16x256xbf16> to vector<16x16xbf16>
    %c0_33 = arith.constant 0 : index
    %c12 = arith.constant 12 : index
    %c0_34 = arith.constant 0 : index
    %67 = vector.load %arg6[%c0_33, %c12, %c0_34] : memref<16x16x16xbf16, #tpu.memory_space<vmem>>, vector<16x1x16xbf16>
    %68 = vector.shape_cast %67 : vector<16x1x16xbf16> to vector<16x16xbf16>
    %69 = vector.shape_cast %66 : vector<16x16xbf16> to vector<16x1x16xbf16>
    tpu.vector_store %arg6[%c0_33, %c12, %c0_34], %69 {strides = array<i32>} : memref<16x16x16xbf16, #tpu.memory_space<vmem>>, vector<16x1x16xbf16>,
    %70 = vector.extract_strided_slice %17 {offsets = [0, 208], sizes = [16, 16], strides = [1, 1]} : vector<16x256xbf16> to vector<16x16xbf16>
    %c0_35 = arith.constant 0 : index
    %c13 = arith.constant 13 : index
    %c0_36 = arith.constant 0 : index
    %71 = vector.load %arg6[%c0_35, %c13, %c0_36] : memref<16x16x16xbf16, #tpu.memory_space<vmem>>, vector<16x1x16xbf16>
    %72 = vector.shape_cast %71 : vector<16x1x16xbf16> to vector<16x16xbf16>
    %73 = vector.shape_cast %70 : vector<16x16xbf16> to vector<16x1x16xbf16>
    tpu.vector_store %arg6[%c0_35, %c13, %c0_36], %73 {strides = array<i32>} : memref<16x16x16xbf16, #tpu.memory_space<vmem>>, vector<16x1x16xbf16>,
    %74 = vector.extract_strided_slice %17 {offsets = [0, 224], sizes = [16, 16], strides = [1, 1]} : vector<16x256xbf16> to vector<16x16xbf16>
    %c0_37 = arith.constant 0 : index
    %c14 = arith.constant 14 : index
    %c0_38 = arith.constant 0 : index
    %75 = vector.load %arg6[%c0_37, %c14, %c0_38] : memref<16x16x16xbf16, #tpu.memory_space<vmem>>, vector<16x1x16xbf16>
    %76 = vector.shape_cast %75 : vector<16x1x16xbf16> to vector<16x16xbf16>
    %77 = vector.shape_cast %74 : vector<16x16xbf16> to vector<16x1x16xbf16>
    tpu.vector_store %arg6[%c0_37, %c14, %c0_38], %77 {strides = array<i32>} : memref<16x16x16xbf16, #tpu.memory_space<vmem>>, vector<16x1x16xbf16>,
    %78 = vector.extract_strided_slice %17 {offsets = [0, 240], sizes = [16, 16], strides = [1, 1]} : vector<16x256xbf16> to vector<16x16xbf16>
    %c0_39 = arith.constant 0 : index
    %c15 = arith.constant 15 : index
    %c0_40 = arith.constant 0 : index
    %79 = vector.load %arg6[%c0_39, %c15, %c0_40] : memref<16x16x16xbf16, #tpu.memory_space<vmem>>, vector<16x1x16xbf16>
    %80 = vector.shape_cast %79 : vector<16x1x16xbf16> to vector<16x16xbf16>
    %81 = vector.shape_cast %78 : vector<16x16xbf16> to vector<16x1x16xbf16>
    tpu.vector_store %arg6[%c0_39, %c15, %c0_40], %81 {strides = array<i32>} : memref<16x16x16xbf16, #tpu.memory_space<vmem>>, vector<16x1x16xbf16>,
    %c0_41 = arith.constant 0 : index
    %c0_42 = arith.constant 0 : index
    %c0_43 = arith.constant 0 : index
    %82 = vector.load %arg6[%c0_41, %c0_42, %c0_43] : memref<16x16x16xbf16, #tpu.memory_space<vmem>>, vector<16x16x16xbf16>
    %83 = vector.extract_strided_slice %82 {offsets = [0, 0, 0], sizes = [8, 16, 16], strides = [1, 1, 1]} : vector<16x16x16xbf16> to vector<8x16x16xbf16>
    %84 = vector.extract_strided_slice %82 {offsets = [8, 0, 0], sizes = [8, 16, 16], strides = [1, 1, 1]} : vector<16x16x16xbf16> to vector<8x16x16xbf16>
    "tpu.trace_start"() <{level = 10 : i32, message = "cik,cjk->cij"}> : () -> ()
    %cst_44 = arith.constant dense<0.000000e+00> : vector<8x16x16xf32>
    %85 = tpu.matmul %83, %84, %cst_44 {dimension_numbers = #tpu.dot_dimension_numbers<[2], [2], [1], [1], [0, 0, 0, 1, 1, 1], [0], [0]>} : vector<8x16x16xbf16>, vector<8x16x16xbf16>, vector<8x16x16xf32> -> vector<8x16x16xf32>
    "tpu.trace_stop"() : () -> ()
    %c0_45 = arith.constant 0 : index
    %c0_46 = arith.constant 0 : index
    %c0_47 = arith.constant 0 : index
    %86 = vector.load %arg5[%c0_45, %c0_46, %c0_47] : memref<8x16x16xf32, #tpu.memory_space<vmem>>, vector<8x16x16xf32>
    tpu.vector_store %arg5[%c0_45, %c0_46, %c0_47], %85 {strides = array<i32>} : memref<8x16x16xf32, #tpu.memory_space<vmem>>, vector<8x16x16xf32>,
    return
  }
  func.func @transform_0(%arg0: i32) -> (i32, i32) {
    %c0_i32 = arith.constant 0 : i32
    %c0_i32_0 = arith.constant 0 : i32
    %c0_i32_1 = arith.constant 0 : i32
    return %c0_i32, %c0_i32_0 : i32, i32
  }
  func.func @transform_1(%arg0: i32) -> (i32, i32) {
    %c0_i32 = arith.constant 0 : i32
    %c0_i32_0 = arith.constant 0 : i32
    %c0_i32_1 = arith.constant 0 : i32
    return %c0_i32, %c0_i32_0 : i32, i32
  }
  func.func @transform_2(%arg0: i32) -> (i32, i32) {
    %c0_i32 = arith.constant 0 : i32
    %c0_i32_0 = arith.constant 0 : i32
    return %arg0, %c0_i32 : i32, i32
  }
  func.func @transform_3(%arg0: i32) -> (i32, i32) {
    %c0_i32 = arith.constant 0 : i32
    %c0_i32_0 = arith.constant 0 : i32
    return %arg0, %c0_i32 : i32, i32
  }
  func.func @transform_4(%arg0: i32) -> (i32, i32, i32) {
    %c0_i32 = arith.constant 0 : i32
    %c0_i32_0 = arith.constant 0 : i32
    %c0_i32_1 = arith.constant 0 : i32
    return %arg0, %c0_i32, %c0_i32_0 : i32, i32, i32
  }
}

</mosaic_0001>

<llo_original>
// kernel: tpu_custom_call.1
$region0: #{tpu_custom_call.1}
  #allocation0 [shape = 'u32[]', space=smem, size = 0x4, offset = 0x4, fixed_abs, tag = 'smem constant byte address 0x4 - core index']
  #allocation1 [shape = 'u32[144,128]{1,0:T(1,128)}', space=vmem, size = 0x12000, scoped, tag = 'internal scratch']
  #allocation2 [shape = 'bf16[16,16,16]{2,1,0:T(8,128)(2,1)}', space=vmem, size = 0x10000, scoped, tag = 'scratch operand']
  %s0 = inlined_call_operand.vmem [shape: f32[256,32], index: 0, kind: input, shape index: {}]
  %s1 = inlined_call_operand.vmem [shape: f32[1,256], index: 1, kind: input, shape index: {}]
  %s2 = inlined_call_operand.vmem [shape: f32[64,32], index: 2, kind: input, shape index: {}]
  %s3 = inlined_call_operand.vmem [shape: f32[64,1], index: 3, kind: input, shape index: {}]
  %s4 = inlined_call_operand.hbm [shape: f32[16,16,16], index: 4, kind: output, shape index: {}]
  %s5 = sld [smem:[#allocation0]]
  $region49: #{tpu_custom_call.1} parent=0
    _
  %s7 = ssub.s32 1, %s5
  %s8 = scalar_select 0, %s7, %s5
  $region1: #{tpu_custom_call.1} parent=0
    #allocation3 [shape = 'u8[131072]{0}', space=vmem, size = 0x20000, scoped, tag = 'output window, operand 0']
    #allocation4 [shape = 's32[2]{0}', space=sflag, size = 0x8, scoped, tag = 'scoped memory for tpu_custom_call.1']
    %9 = vsyncpa [#allocation4], 0
    %s10 = scalar_lea.sflag [#allocation4], 1
    %11 = vsyncpa %s10, 0
    loop: start=0, step=1, limit=4
    $region2: #{tpu_custom_call.1} parent=1 // loop_pre_header
      _
    $region3: #{tpu_custom_call.1} parent=1 // loop_header
      %s13 = sphi 0, %s17
      %p14 = scmp.ge.s32.totalorder %s13, 4
      %s21 = sphi 0, %s21
      %s23 = sphi 0, %s21
      %s24 = sphi 0, %s23
      %s38 = sphi 0, %s24
      %s42 = sphi 0, %s42
      %s44 = sphi 0, %s42
      %s45 = sphi 0, %s44
      %s59 = sphi 0, %s45
      %s65 = sphi 0, %s67
      %s68 = sphi 0, %s65
      %s69 = sphi 0, %s68
      %s85 = sphi 0, %s69
      %s91 = sphi 0, %s93
      %s94 = sphi 0, %s91
      %s95 = sphi 0, %s94
      %s111 = sphi 0, %s95
      %s117 = sphi 0, %s119
      %s120 = sphi 0, %s117
      %s121 = sphi 0, %s120
      %s137 = sphi 0, %s121
    $region4: #{tpu_custom_call.1} parent=1 // loop_header_branch
      %16 = sbr.rel (%p14) target = $region8
    $region5: #{tpu_custom_call.1} parent=1 // loop_body
      %s18 = ssub.s32 %s13, 1
      %s19 = ssub.s32 %s13, 2
      %s20 = sadd.s32 %s13, 1
      %s22 = sadd.s32 %s21, 1
      %p25 = scmp.eq.s32.totalorder %s13, 1
      %p26 = scmp.ne.s32.totalorder %s21, %s23
      %p27 = scmp.eq.s32.totalorder %s13, 0
      %p28 = por %p26, %p27
      %p29 = scmp.ne.s32.totalorder %s21, %s23
      %p30 = scmp.eq.s32.totalorder %s18, 1
      %p31 = por %p29, %p30
      %p32 = scmp.ne.s32.totalorder %s23, %s24
      %p33 = scmp.eq.s32.totalorder %s18, 0
      %p34 = por %p32, %p33
      %p35 = scmp.ne.s32.totalorder %s23, %s24
      %p36 = scmp.eq.s32.totalorder %s19, 1
      %p37 = por %p35, %p36
      %p39 = scmp.ne.s32.totalorder %s24, %s38
      %p40 = scmp.eq.s32.totalorder %s19, 0
      %p41 = por %p39, %p40
      %s43 = sadd.s32 %s42, 1
      %p46 = scmp.eq.s32.totalorder %s13, 1
      %p47 = scmp.ne.s32.totalorder %s42, %s44
      %p48 = scmp.eq.s32.totalorder %s13, 0
      %p49 = por %p47, %p48
      %p50 = scmp.ne.s32.totalorder %s42, %s44
      %p51 = scmp.eq.s32.totalorder %s18, 1
      %p52 = por %p50, %p51
      %p53 = scmp.ne.s32.totalorder %s44, %s45
      %p54 = scmp.eq.s32.totalorder %s18, 0
      %p55 = por %p53, %p54
      %p56 = scmp.ne.s32.totalorder %s44, %s45
      %p57 = scmp.eq.s32.totalorder %s19, 1
      %p58 = por %p56, %p57
      %p60 = scmp.ne.s32.totalorder %s45, %s59
      %p61 = scmp.eq.s32.totalorder %s19, 0
      %p62 = por %p60, %p61
      %s63 = ssub.s32 %s13, %s20
      %p64 = scmp.eq.s32.totalorder %s63, 0
      %s66 = sadd.s32 %s65, 1
      %s67 = scalar_select %p64, %s65, %s66
      %p70 = pneg %p64
      %p71 = scmp.eq.s32.totalorder %s13, 1
      %p72 = por %p70, %p71
      %p73 = scmp.ne.s32.totalorder %s65, %s68
      %p74 = scmp.eq.s32.totalorder %s13, 0
      %p75 = por %p73, %p74
      %p76 = scmp.ne.s32.totalorder %s65, %s68
      %p77 = scmp.eq.s32.totalorder %s18, 1
      %p78 = por %p76, %p77
      %p79 = scmp.ne.s32.totalorder %s68, %s69
      %p80 = scmp.eq.s32.totalorder %s18, 0
      %p81 = por %p79, %p80
      %p82 = scmp.ne.s32.totalorder %s68, %s69
      %p83 = scmp.eq.s32.totalorder %s19, 1
      %p84 = por %p82, %p83
      %p86 = scmp.ne.s32.totalorder %s69, %s85
      %p87 = scmp.eq.s32.totalorder %s19, 0
      %p88 = por %p86, %p87
      %s89 = ssub.s32 %s13, %s20
      %p90 = scmp.eq.s32.totalorder %s89, 0
      %s92 = sadd.s32 %s91, 1
      %s93 = scalar_select %p90, %s91, %s92
      %p96 = pneg %p90
      %p97 = scmp.eq.s32.totalorder %s13, 1
      %p98 = por %p96, %p97
      %p99 = scmp.ne.s32.totalorder %s91, %s94
      %p100 = scmp.eq.s32.totalorder %s13, 0
      %p101 = por %p99, %p100
      %p102 = scmp.ne.s32.totalorder %s91, %s94
      %p103 = scmp.eq.s32.totalorder %s18, 1
      %p104 = por %p102, %p103
      %p105 = scmp.ne.s32.totalorder %s94, %s95
      %p106 = scmp.eq.s32.totalorder %s18, 0
      %p107 = por %p105, %p106
      %p108 = scmp.ne.s32.totalorder %s94, %s95
      %p109 = scmp.eq.s32.totalorder %s19, 1
      %p110 = por %p108, %p109
      %p112 = scmp.ne.s32.totalorder %s95, %s111
      %p113 = scmp.eq.s32.totalorder %s19, 0
      %p114 = por %p112, %p113
      %s115 = ssub.s32 %s13, %s20
      %p116 = scmp.eq.s32.totalorder %s115, 0
      %s118 = sadd.s32 %s117, 1
      %s119 = scalar_select %p116, %s117, %s118
      %p122 = pneg %p116
      %p123 = scmp.eq.s32.totalorder %s13, 1
      %p124 = por %p122, %p123
      %p125 = scmp.ne.s32.totalorder %s117, %s120
      %p126 = scmp.eq.s32.totalorder %s13, 0
      %p127 = por %p125, %p126
      %p128 = scmp.ne.s32.totalorder %s117, %s120
      %p129 = scmp.eq.s32.totalorder %s18, 1
      %p130 = por %p128, %p129
      %p131 = scmp.ne.s32.totalorder %s120, %s121
      %p132 = scmp.eq.s32.totalorder %s18, 0
      %p133 = por %p131, %p132
      %p134 = scmp.ne.s32.totalorder %s120, %s121
      %p135 = scmp.eq.s32.totalorder %s19, 1
      %p136 = por %p134, %p135
      %p138 = scmp.ne.s32.totalorder %s121, %s137
      %p139 = scmp.eq.s32.totalorder %s19, 0
      %p140 = por %p138, %p139
      %p141 = scmp.le.s32.totalorder 1, %s13
      %p142 = scmp.lt.s32.totalorder %s13, 3
      %p143 = pnand %p141, %p142
      %p144 = pneg %p143
      // Predicated region
      $region9: #{tpu_custom_call.1} parent=5 // pred_check
        _
      $region10: #{tpu_custom_call.1} parent=5 // pred_check_branch
        %146 = sbr.rel (%p143) target = $region12
      $region11: #{tpu_custom_call.1} parent=5 // pred_region
        %s147 = ssub.s32 %s13, 1
        // Predicated region
        $region13: #{tpu_custom_call.1} parent=11 // pred_check
          %p148 = pneg %p34
        $region14: #{tpu_custom_call.1} parent=11 // pred_check_branch
          %150 = sbr.rel (%p148) target = $region16
        $region15: #{tpu_custom_call.1} parent=11 // pred_region
          _
        $region16: #{tpu_custom_call.1} parent=11 // pred_fallthru
          _
        // Predicated region
        $region17: #{tpu_custom_call.1} parent=11 // pred_check
          %p151 = pneg %p55
        $region18: #{tpu_custom_call.1} parent=11 // pred_check_branch
          %153 = sbr.rel (%p151) target = $region20
        $region19: #{tpu_custom_call.1} parent=11 // pred_region
          _
        $region20: #{tpu_custom_call.1} parent=11 // pred_fallthru
          _
      $region12: #{tpu_custom_call.1} parent=5 // pred_fallthru
        _
      %p154 = scmp.lt.s32.totalorder %s13, 2
      // Predicated region
      $region21: #{tpu_custom_call.1} parent=5 // pred_check
        %p155 = pneg %p154
      $region22: #{tpu_custom_call.1} parent=5 // pred_check_branch
        %157 = sbr.rel (%p155) target = $region24
      $region23: #{tpu_custom_call.1} parent=5 // pred_region
        // Predicated region
        $region25: #{tpu_custom_call.1} parent=23 // pred_check
          %p158 = pneg %p75
        $region26: #{tpu_custom_call.1} parent=23 // pred_check_branch
          %160 = sbr.rel (%p158) target = $region28
        $region27: #{tpu_custom_call.1} parent=23 // pred_region
          %s161 = smul.u32 4, %s13
          %p162 = scmp.lt.s32.totalorder %s161, 7
          %s163 = scalar_select %p162, %s161, 7
          %s164 = smul.addr %s163, 8
          %s165 = scalar_lea.vmem %s2, %s164
          %s166 = smul.u32 4, %s13
        $region28: #{tpu_custom_call.1} parent=23 // pred_fallthru
          _
        // Predicated region
        $region29: #{tpu_custom_call.1} parent=23 // pred_check
          %p167 = pneg %p101
        $region30: #{tpu_custom_call.1} parent=23 // pred_check_branch
          %169 = sbr.rel (%p167) target = $region32
        $region31: #{tpu_custom_call.1} parent=23 // pred_region
          %s170 = smul.u32 4, %s13
          %p171 = scmp.lt.s32.totalorder %s170, 7
          %s172 = scalar_select %p171, %s170, 7
          %s173 = smul.addr %s172, 8
          %s174 = scalar_lea.vmem %s3, %s173
          %s175 = smul.u32 4, %s13
        $region32: #{tpu_custom_call.1} parent=23 // pred_fallthru
          _
      $region24: #{tpu_custom_call.1} parent=5 // pred_fallthru
        _
      %p176 = scmp.le.s32.totalorder 1, %s13
      %p177 = scmp.lt.s32.totalorder %s13, 3
      %p178 = pnand %p176, %p177
      %p179 = pneg %p178
      // Predicated region
      $region33: #{tpu_custom_call.1} parent=5 // pred_check
        _
      $region34: #{tpu_custom_call.1} parent=5 // pred_check_branch
        %181 = sbr.rel (%p178) target = $region36
      $region35: #{tpu_custom_call.1} parent=5 // pred_region
        %s182 = ssub.s32 %s13, 1
        %p183 = pneg %p34
        %p184 = pneg %p31
        %p185 = pneg %p55
        %p186 = pneg %p52
        %s187 = smul.u32 4, %s18
        %p188 = scmp.lt.s32.totalorder %s187, 7
        %s189 = scalar_select %p188, %s187, 7
        %s190 = smul.addr %s189, 8
        %s191 = scalar_lea.vmem %s2, %s190
        %p192 = pneg %p81
        %p193 = pneg %p78
        %s194 = smul.u32 4, %s18
        %p195 = scmp.lt.s32.totalorder %s194, 7
        %s196 = scalar_select %p195, %s194, 7
        %s197 = smul.addr %s196, 8
        %s198 = scalar_lea.vmem %s3, %s197
        %p199 = pneg %p107
        %p200 = pneg %p104
        %p201 = pneg %p133
        %p202 = pneg %p130
        %s203 = sand.u32 %s120, 1
        %s204 = scalar_lea.sflag [#allocation4], %s203
        %s205 = sand.u32 %s120, 1
        %s206 = smul.addr %s205, 128
        %s207 = scalar_lea.vmem [#allocation3], %s206
        %s208 = smul.u32 4, %s18
        %p209 = scmp.lt.s32.totalorder %s208, 7
        %s210 = scalar_select %p209, %s208, 7
        %s211 = smul.addr %s210, 8
        %s212 = scalar_lea.vmem %s2, %s211
        %s213 = smul.u32 4, %s18
        %s214 = smul.u32 4, %s18
        %p215 = scmp.lt.s32.totalorder %s214, 7
        %s216 = scalar_select %p215, %s214, 7
        %s217 = smul.addr %s216, 8
        %s218 = scalar_lea.vmem %s3, %s217
        %s219 = smul.u32 4, %s18
        %s220 = smul.u32 8, %s18
        %v222 = vld [vmem:[%s0] sm:$0xff]
        %v223 = vld [vmem:[%s0 + $0x8] sm:$0xff]
        %v224 = vld [vmem:[%s0 + $0x10] sm:$0xff]
        %v225 = vld [vmem:[%s0 + $0x18] sm:$0xff]
        %v226 = vld [vmem:[%s0 + $0x20] sm:$0xff]
        %v227 = vld [vmem:[%s0 + $0x28] sm:$0xff]
        %v228 = vld [vmem:[%s0 + $0x30] sm:$0xff]
        %v229 = vld [vmem:[%s0 + $0x38] sm:$0xff]
        %v230 = vld [vmem:[%s0 + $0x40] sm:$0xff]
        %v231 = vld [vmem:[%s0 + $0x48] sm:$0xff]
        %v232 = vld [vmem:[%s0 + $0x50] sm:$0xff]
        %v233 = vld [vmem:[%s0 + $0x58] sm:$0xff]
        %v234 = vld [vmem:[%s0 + $0x60] sm:$0xff]
        %v235 = vld [vmem:[%s0 + $0x68] sm:$0xff]
        %v236 = vld [vmem:[%s0 + $0x70] sm:$0xff]
        %v237 = vld [vmem:[%s0 + $0x78] sm:$0xff]
        %v238 = vld [vmem:[%s0 + $0x80] sm:$0xff]
        %v239 = vld [vmem:[%s0 + $0x88] sm:$0xff]
        %v240 = vld [vmem:[%s0 + $0x90] sm:$0xff]
        %v241 = vld [vmem:[%s0 + $0x98] sm:$0xff]
        %v242 = vld [vmem:[%s0 + $0xa0] sm:$0xff]
        %v243 = vld [vmem:[%s0 + $0xa8] sm:$0xff]
        %v244 = vld [vmem:[%s0 + $0xb0] sm:$0xff]
        %v245 = vld [vmem:[%s0 + $0xb8] sm:$0xff]
        %v246 = vld [vmem:[%s0 + $0xc0] sm:$0xff]
        %v247 = vld [vmem:[%s0 + $0xc8] sm:$0xff]
        %v248 = vld [vmem:[%s0 + $0xd0] sm:$0xff]
        %v249 = vld [vmem:[%s0 + $0xd8] sm:$0xff]
        %v250 = vld [vmem:[%s0 + $0xe0] sm:$0xff]
        %v251 = vld [vmem:[%s0 + $0xe8] sm:$0xff]
        %v252 = vld [vmem:[%s0 + $0xf0] sm:$0xff]
        %v253 = vld [vmem:[%s0 + $0xf8] sm:$0xff]
        %v254 = vld [vmem:[%s1] sm:$0x3]
        %v255 = vld [vmem:[%s212] sm:$0xff]
        %v256 = vld [vmem:[%s212 + $0x8] sm:$0xff]
        %v257 = vld [vmem:[%s212 + $0x10] sm:$0xff]
        %v258 = vld [vmem:[%s212 + $0x18] sm:$0xff]
        %v259 = vld [vmem:[%s218] sm:$0xff]
        %v260 = vld [vmem:[%s218 + $0x8] sm:$0xff]
        %v261 = vld [vmem:[%s218 + $0x10] sm:$0xff]
        %v262 = vld [vmem:[%s218 + $0x18] sm:$0xff]
        %264 = vset.pattern.permute.xlu0 0
        %265 = vperm.xlu0 %264, %v259
        %v266 = vpop.permute.xlu0 %265
        %269 = vset.pattern.permute.xlu0 0
        %270 = vperm.xlu0 %269, %v260
        %v271 = vpop.permute.xlu0 %270
        %274 = vset.pattern.permute.xlu0 0
        %275 = vperm.xlu0 %274, %v261
        %v276 = vpop.permute.xlu0 %275
        %279 = vset.pattern.permute.xlu0 0
        %280 = vperm.xlu0 %279, %v262
        %v281 = vpop.permute.xlu0 %280
        %vm283 = vcmask 261120
        %v285 = vsel %vm283, %v255, 0
        %v288 = vsel %vm283, %v256, 0
        %v291 = vsel %vm283, %v257, 0
        %v294 = vsel %vm283, %v258, 0
        %v297 = vsel %vm283, %v222, 0
        %v300 = vsel %vm283, %v223, 0
        %v303 = vsel %vm283, %v224, 0
        %v306 = vsel %vm283, %v225, 0
        %v309 = vsel %vm283, %v226, 0
        %v312 = vsel %vm283, %v227, 0
        %v315 = vsel %vm283, %v228, 0
        %v318 = vsel %vm283, %v229, 0
        %v321 = vsel %vm283, %v230, 0
        %v324 = vsel %vm283, %v231, 0
        %v327 = vsel %vm283, %v232, 0
        %v330 = vsel %vm283, %v233, 0
        %v333 = vsel %vm283, %v234, 0
        %v336 = vsel %vm283, %v235, 0
        %v339 = vsel %vm283, %v236, 0
        %v342 = vsel %vm283, %v237, 0
        %v345 = vsel %vm283, %v238, 0
        %v348 = vsel %vm283, %v239, 0
        %v351 = vsel %vm283, %v240, 0
        %v354 = vsel %vm283, %v241, 0
        %v357 = vsel %vm283, %v242, 0
        %v360 = vsel %vm283, %v243, 0
        %v363 = vsel %vm283, %v244, 0
        %v366 = vsel %vm283, %v245, 0
        %v369 = vsel %vm283, %v246, 0
        %v372 = vsel %vm283, %v247, 0
        %v375 = vsel %vm283, %v248, 0
        %v378 = vsel %vm283, %v249, 0
        %v381 = vsel %vm283, %v250, 0
        %v384 = vsel %vm283, %v251, 0
        %v387 = vsel %vm283, %v252, 0
        %v390 = vsel %vm283, %v253, 0
        %392 = vmatprep.subr.mxu0 0.0
        %393 = vmatpush1.xpose.msra.mxu0 %v342
        %394 = vmatprep.subr.mxu0 0.0
        %395 = vmatpush1.xpose.msra.mxu0 %v339
        %396 = vmatprep.subr.mxu0 0.0
        %397 = vmatpush1.xpose.msra.mxu0 %v336
        %398 = vmatprep.subr.mxu0 0.0
        %399 = vmatpush1.xpose.msra.mxu0 %v333
        %400 = vmatprep.subr.mxu0 0.0
        %401 = vmatpush1.xpose.msra.mxu0 %v330
        %402 = vmatprep.subr.mxu0 0.0
        %403 = vmatpush1.xpose.msra.mxu0 %v327
        %404 = vmatprep.subr.mxu0 0.0
        %405 = vmatpush1.xpose.msra.mxu0 %v324
        %406 = vmatprep.subr.mxu0 0.0
        %407 = vmatpush1.xpose.msra.mxu0 %v321
        %408 = vmatprep.subr.mxu0 0.0
        %409 = vmatpush1.xpose.msra.mxu0 %v318
        %410 = vmatprep.subr.mxu0 0.0
        %411 = vmatpush1.xpose.msra.mxu0 %v315
        %412 = vmatprep.subr.mxu0 0.0
        %413 = vmatpush1.xpose.msra.mxu0 %v312
        %414 = vmatprep.subr.mxu0 0.0
        %415 = vmatpush1.xpose.msra.mxu0 %v309
        %416 = vmatprep.subr.mxu0 0.0
        %417 = vmatpush1.xpose.msra.mxu0 %v306
        %418 = vmatprep.subr.mxu0 0.0
        %419 = vmatpush1.xpose.msra.mxu0 %v303
        %420 = vmatprep.subr.mxu0 0.0
        %421 = vmatpush1.xpose.msra.mxu0 %v300
        %422 = vmatprep.subr.mxu0 0.0
        %423 = vmatpush1.xpose.msra.mxu0 %v297
        %424 = vmatprep.subr.mxu0 0.0
        %425 = vmatpush2.xpose.msra.mxu0 %v390
        %426 = vmatprep.subr.mxu0 0.0
        %427 = vmatpush2.xpose.msra.mxu0 %v387
        %428 = vmatprep.subr.mxu0 0.0
        %429 = vmatpush2.xpose.msra.mxu0 %v384
        %430 = vmatprep.subr.mxu0 0.0
        %431 = vmatpush2.xpose.msra.mxu0 %v381
        %432 = vmatprep.subr.mxu0 0.0
        %433 = vmatpush2.xpose.msra.mxu0 %v378
        %434 = vmatprep.subr.mxu0 0.0
        %435 = vmatpush2.xpose.msra.mxu0 %v375
        %436 = vmatprep.subr.mxu0 0.0
        %437 = vmatpush2.xpose.msra.mxu0 %v372
        %438 = vmatprep.subr.mxu0 0.0
        %439 = vmatpush2.xpose.msra.mxu0 %v369
        %440 = vmatprep.subr.mxu0 0.0
        %441 = vmatpush2.xpose.msra.mxu0 %v366
        %442 = vmatprep.subr.mxu0 0.0
        %443 = vmatpush2.xpose.msra.mxu0 %v363
        %444 = vmatprep.subr.mxu0 0.0
        %445 = vmatpush2.xpose.msra.mxu0 %v360
        %446 = vmatprep.subr.mxu0 0.0
        %447 = vmatpush2.xpose.msra.mxu0 %v357
        %448 = vmatprep.subr.mxu0 0.0
        %449 = vmatpush2.xpose.msra.mxu0 %v354
        %450 = vmatprep.subr.mxu0 0.0
        %451 = vmatpush2.xpose.msra.mxu0 %v351
        %452 = vmatprep.subr.mxu0 0.0
        %453 = vmatpush2.xpose.msra.mxu0 %v348
        %454 = vmatprep.subr.mxu0 0.0
        %455 = vmatpush2.xpose.msra.mxu0 %v345
        %456 = vmatprep.mubr.f32.mxu0 0.0
        %457 = vmatmul.mubr.f32.gmra.mxu0 %v285
        %v458 = vpop.f32.mrf.mxu0
        %v459 = vadd.f32 %v266, %v458
        %v460 = vpop.f32.mrf.mxu0
        %v461 = vadd.f32 %v266, %v460
        %462 = vmatprep.mubr.f32.mxu0 0.0
        %463 = vmatmul.mubr.f32.gmra.mxu0 %v288
        %v464 = vpop.f32.mrf.mxu0
        %v465 = vadd.f32 %v271, %v464
        %v466 = vpop.f32.mrf.mxu0
        %v467 = vadd.f32 %v271, %v466
        %468 = vmatprep.mubr.f32.mxu0 0.0
        %469 = vmatmul.mubr.f32.gmra.mxu0 %v291
        %v470 = vpop.f32.mrf.mxu0
        %v471 = vadd.f32 %v276, %v470
        %v472 = vpop.f32.mrf.mxu0
        %v473 = vadd.f32 %v276, %v472
        %474 = vmatprep.mubr.f32.mxu0 0.0
        %475 = vmatmul.mubr.f32.gmra.mxu0 %v294
        %v476 = vpop.f32.mrf.mxu0
        %v477 = vadd.f32 %v281, %v476
        %v478 = vpop.f32.mrf.mxu0
        %v479 = vadd.f32 %v281, %v478
        %480 = vdwg.mxu0
        %v481 = vxor.u32 %v459, 2147483648
        %v482 = vxor.u32 %v461, 2147483648
        %v483 = vxor.u32 %v465, 2147483648
        %v484 = vxor.u32 %v467, 2147483648
        %v485 = vmul.f32 %v481, 1.442695
        %v486 = vpow.pop %v485
        %v487 = vmul.f32 %v482, 1.442695
        %v488 = vpow.pop %v487
        %v489 = vmul.f32 %v483, 1.442695
        %v490 = vpow.pop %v489
        %v491 = vmul.f32 %v484, 1.442695
        %v492 = vpow.pop %v491
        %v493 = vadd.f32 %v486, 1.0
        %v494 = vadd.f32 %v488, 1.0
        %v495 = vadd.f32 %v490, 1.0
        %v496 = vadd.f32 %v492, 1.0
        %v497 = vrcp.pop %v493
        %v498 = vmul.f32 1.0, %v497
        %v499 = vrcp.pop %v494
        %v500 = vmul.f32 1.0, %v499
        %v501 = vrcp.pop %v495
        %v502 = vmul.f32 1.0, %v501
        %v503 = vrcp.pop %v496
        %v504 = vmul.f32 1.0, %v503
        %v506 = vlaneseq
        %v507 = vshrl.u32 %v506, 7
        %v508 = vsub.s32 0, %v507
        %v509 = vrot.slane %v254, %v508
        %v510 = vlaneseq
        %v511 = vshrl.u32 %v510, 7
        %v512 = vsub.s32 1, %v511
        %v513 = vrot.slane %v254, %v512
        %v516 = vmul.f32 %v509, %v498
        %v517 = vmul.f32 %v513, %v500
        %v518 = vmul.f32 %v509, %v502
        %v519 = vmul.f32 %v513, %v504
        %v520 = vmul.f32 %v516, %v471
        %v521 = vmul.f32 %v517, %v473
        %v522 = vmul.f32 %v518, %v477
        %v523 = vmul.f32 %v519, %v479
        %v524 = vpack.c.bf16 %v522, %v520
        %v525 = vpack.c.bf16 %v523, %v521
        %v527 = vcombine.high %v524, %v524
        %v529 = vunpack.c.l.s4 1966171168
        %v530 = vunpack.c.0.s8 %v529
        %v531 = vlaneseq
        %v532 = vshrl.u32 %v531, 7
        %v533 = vsub.s32 %v530, %v532
        %v534 = vrot.slane %v524, %v533
        %v536 = vunpack.c.l.s4 1966171168
        %v537 = vunpack.c.0.s8 %v536
        %v538 = vlaneseq
        %v539 = vshrl.u32 %v538, 7
        %v540 = vsub.s32 %v537, %v539
        %v541 = vrot.slane %v527, %v540
        %v542 = vcombine.high %v534, %v534
        %v543 = vcombine.high %v541, %v541
        %v545 = vunpack.c.l.s4 1966171168
        %v546 = vunpack.c.0.s8 %v545
        %v547 = vlaneseq
        %v548 = vshrl.u32 %v547, 7
        %v549 = vsub.s32 %v546, %v548
        %v550 = vrot.slane %v534, %v549
        %v552 = vunpack.c.l.s4 1966171168
        %v553 = vunpack.c.0.s8 %v552
        %v554 = vlaneseq
        %v555 = vshrl.u32 %v554, 7
        %v556 = vsub.s32 %v553, %v555
        %v557 = vrot.slane %v541, %v556
        %v559 = vunpack.c.l.s4 1966171168
        %v560 = vunpack.c.0.s8 %v559
        %v561 = vlaneseq
        %v562 = vshrl.u32 %v561, 7
        %v563 = vsub.s32 %v560, %v562
        %v564 = vrot.slane %v542, %v563
        %v566 = vunpack.c.l.s4 1966171168
        %v567 = vunpack.c.0.s8 %v566
        %v568 = vlaneseq
        %v569 = vshrl.u32 %v568, 7
        %v570 = vsub.s32 %v567, %v569
        %v571 = vrot.slane %v543, %v570
        %v572 = vcombine.high %v550, %v550
        %v573 = vcombine.high %v557, %v557
        %v574 = vcombine.high %v564, %v564
        %v575 = vcombine.high %v571, %v571
        %v576 = vunpack.i.l.s16 %v550
        %v577 = vunpack.i.h.s16 %v550
        %v578 = vunpack.i.l.s16 %v564
        %v579 = vunpack.i.h.s16 %v564
        %v580 = vunpack.i.l.s16 %v572
        %v581 = vunpack.i.h.s16 %v572
        %v582 = vunpack.i.l.s16 %v574
        %v583 = vunpack.i.h.s16 %v574
        %v584 = vunpack.i.l.s16 %v557
        %v585 = vunpack.i.h.s16 %v557
        %v586 = vunpack.i.l.s16 %v571
        %v587 = vunpack.i.h.s16 %v571
        %v588 = vunpack.i.l.s16 %v573
        %v589 = vunpack.i.h.s16 %v573
        %v590 = vunpack.i.l.s16 %v575
        %v591 = vunpack.i.h.s16 %v575
        %v592 = vpack.i.b16 %v576, %v576
        %v593 = vpack.i.b16 %v577, %v577
        %v594 = vpack.i.b16 %v578, %v578
        %v595 = vpack.i.b16 %v579, %v579
        %v596 = vpack.i.b16 %v580, %v580
        %v597 = vpack.i.b16 %v581, %v581
        %v598 = vpack.i.b16 %v582, %v582
        %v599 = vpack.i.b16 %v583, %v583
        %v600 = vpack.i.b16 %v584, %v584
        %v601 = vpack.i.b16 %v585, %v585
        %v602 = vpack.i.b16 %v586, %v586
        %v603 = vpack.i.b16 %v587, %v587
        %v604 = vpack.i.b16 %v588, %v588
        %v605 = vpack.i.b16 %v589, %v589
        %v606 = vpack.i.b16 %v590, %v590
        %v607 = vpack.i.b16 %v591, %v591
        %v609 = vunpack.c.l.s4 286326784
        %v610 = vunpack.c.0.s8 %v609
        %v611 = vlaneseq
        %v612 = vshrl.u32 %v611, 7
        %v613 = vsub.s32 %v610, %v612
        %v614 = vrot.slane %v592, %v613
        %v616 = vunpack.c.l.s4 286326784
        %v617 = vunpack.c.0.s8 %v616
        %v618 = vlaneseq
        %v619 = vshrl.u32 %v618, 7
        %v620 = vsub.s32 %v617, %v619
        %v621 = vrot.slane %v593, %v620
        %v623 = vunpack.c.l.s4 286326784
        %v624 = vunpack.c.0.s8 %v623
        %v625 = vlaneseq
        %v626 = vshrl.u32 %v625, 7
        %v627 = vsub.s32 %v624, %v626
        %v628 = vrot.slane %v594, %v627
        %v630 = vunpack.c.l.s4 286326784
        %v631 = vunpack.c.0.s8 %v630
        %v632 = vlaneseq
        %v633 = vshrl.u32 %v632, 7
        %v634 = vsub.s32 %v631, %v633
        %v635 = vrot.slane %v595, %v634
        %v637 = vunpack.c.l.s4 286326784
        %v638 = vunpack.c.0.s8 %v637
        %v639 = vlaneseq
        %v640 = vshrl.u32 %v639, 7
        %v641 = vsub.s32 %v638, %v640
        %v642 = vrot.slane %v596, %v641
        %v644 = vunpack.c.l.s4 286326784
        %v645 = vunpack.c.0.s8 %v644
        %v646 = vlaneseq
        %v647 = vshrl.u32 %v646, 7
        %v648 = vsub.s32 %v645, %v647
        %v649 = vrot.slane %v597, %v648
        %v651 = vunpack.c.l.s4 286326784
        %v652 = vunpack.c.0.s8 %v651
        %v653 = vlaneseq
        %v654 = vshrl.u32 %v653, 7
        %v655 = vsub.s32 %v652, %v654
        %v656 = vrot.slane %v598, %v655
        %v658 = vunpack.c.l.s4 286326784
        %v659 = vunpack.c.0.s8 %v658
        %v660 = vlaneseq
        %v661 = vshrl.u32 %v660, 7
        %v662 = vsub.s32 %v659, %v661
        %v663 = vrot.slane %v599, %v662
        %v665 = vunpack.c.l.s4 286326784
        %v666 = vunpack.c.0.s8 %v665
        %v667 = vlaneseq
        %v668 = vshrl.u32 %v667, 7
        %v669 = vsub.s32 %v666, %v668
        %v670 = vrot.slane %v600, %v669
        %v672 = vunpack.c.l.s4 286326784
        %v673 = vunpack.c.0.s8 %v672
        %v674 = vlaneseq
        %v675 = vshrl.u32 %v674, 7
        %v676 = vsub.s32 %v673, %v675
        %v677 = vrot.slane %v601, %v676
        %v679 = vunpack.c.l.s4 286326784
        %v680 = vunpack.c.0.s8 %v679
        %v681 = vlaneseq
        %v682 = vshrl.u32 %v681, 7
        %v683 = vsub.s32 %v680, %v682
        %v684 = vrot.slane %v602, %v683
        %v686 = vunpack.c.l.s4 286326784
        %v687 = vunpack.c.0.s8 %v686
        %v688 = vlaneseq
        %v689 = vshrl.u32 %v688, 7
        %v690 = vsub.s32 %v687, %v689
        %v691 = vrot.slane %v603, %v690
        %v693 = vunpack.c.l.s4 286326784
        %v694 = vunpack.c.0.s8 %v693
        %v695 = vlaneseq
        %v696 = vshrl.u32 %v695, 7
        %v697 = vsub.s32 %v694, %v696
        %v698 = vrot.slane %v604, %v697
        %v700 = vunpack.c.l.s4 286326784
        %v701 = vunpack.c.0.s8 %v700
        %v702 = vlaneseq
        %v703 = vshrl.u32 %v702, 7
        %v704 = vsub.s32 %v701, %v703
        %v705 = vrot.slane %v605, %v704
        %v707 = vunpack.c.l.s4 286326784
        %v708 = vunpack.c.0.s8 %v707
        %v709 = vlaneseq
        %v710 = vshrl.u32 %v709, 7
        %v711 = vsub.s32 %v708, %v710
        %v712 = vrot.slane %v606, %v711
        %v714 = vunpack.c.l.s4 286326784
        %v715 = vunpack.c.0.s8 %v714
        %v716 = vlaneseq
        %v717 = vshrl.u32 %v716, 7
        %v718 = vsub.s32 %v715, %v717
        %v719 = vrot.slane %v607, %v718
        %vm736 = vcmask 122880
        %vm737 = vsmask.f32 256
        %vm738 = vmand %vm736, %vm737
        %v739 = vld [vmem:[#allocation2] sm:$0x1]
        %v740 = vsel %vm738, %v614, %v739
        %741 = vst [vmem:[#allocation2] sm:$0x1] %v740
        %v742 = vld [vmem:[#allocation2 + $0x8] sm:$0x1]
        %v743 = vsel %vm738, %v621, %v742
        %744 = vst [vmem:[#allocation2 + $0x8] sm:$0x1] %v743
        %v745 = vld [vmem:[#allocation2 + $0x10] sm:$0x1]
        %v746 = vsel %vm738, %v628, %v745
        %747 = vst [vmem:[#allocation2 + $0x10] sm:$0x1] %v746
        %v748 = vld [vmem:[#allocation2 + $0x18] sm:$0x1]
        %v749 = vsel %vm738, %v635, %v748
        %750 = vst [vmem:[#allocation2 + $0x18] sm:$0x1] %v749
        %v751 = vld [vmem:[#allocation2 + $0x20] sm:$0x1]
        %v752 = vsel %vm738, %v642, %v751
        %753 = vst [vmem:[#allocation2 + $0x20] sm:$0x1] %v752
        %v754 = vld [vmem:[#allocation2 + $0x28] sm:$0x1]
        %v755 = vsel %vm738, %v649, %v754
        %756 = vst [vmem:[#allocation2 + $0x28] sm:$0x1] %v755
        %v757 = vld [vmem:[#allocation2 + $0x30] sm:$0x1]
        %v758 = vsel %vm738, %v656, %v757
        %759 = vst [vmem:[#allocation2 + $0x30] sm:$0x1] %v758
        %v760 = vld [vmem:[#allocation2 + $0x38] sm:$0x1]
        %v761 = vsel %vm738, %v663, %v760
        %762 = vst [vmem:[#allocation2 + $0x38] sm:$0x1] %v761
        %v763 = vld [vmem:[#allocation2 + $0x40] sm:$0x1]
        %v764 = vsel %vm738, %v670, %v763
        %765 = vst [vmem:[#allocation2 + $0x40] sm:$0x1] %v764
        %v766 = vld [vmem:[#allocation2 + $0x48] sm:$0x1]
        %v767 = vsel %vm738, %v677, %v766
        %768 = vst [vmem:[#allocation2 + $0x48] sm:$0x1] %v767
        %v769 = vld [vmem:[#allocation2 + $0x50] sm:$0x1]
        %v770 = vsel %vm738, %v684, %v769
        %771 = vst [vmem:[#allocation2 + $0x50] sm:$0x1] %v770
        %v772 = vld [vmem:[#allocation2 + $0x58] sm:$0x1]
        %v773 = vsel %vm738, %v691, %v772
        %774 = vst [vmem:[#allocation2 + $0x58] sm:$0x1] %v773
        %v775 = vld [vmem:[#allocation2 + $0x60] sm:$0x1]
        %v776 = vsel %vm738, %v698, %v775
        %777 = vst [vmem:[#allocation2 + $0x60] sm:$0x1] %v776
        %v778 = vld [vmem:[#allocation2 + $0x68] sm:$0x1]
        %v779 = vsel %vm738, %v705, %v778
        %780 = vst [vmem:[#allocation2 + $0x68] sm:$0x1] %v779
        %v781 = vld [vmem:[#allocation2 + $0x70] sm:$0x1]
        %v782 = vsel %vm738, %v712, %v781
        %783 = vst [vmem:[#allocation2 + $0x70] sm:$0x1] %v782
        %v784 = vld [vmem:[#allocation2 + $0x78] sm:$0x1]
        %v785 = vsel %vm738, %v719, %v784
        %786 = vst [vmem:[#allocation2 + $0x78] sm:$0x1] %v785
        %787 = vrot.lane.b32.xlu0 %v614, 112
        %v788 = vpop.permute.xlu0 %787
        %789 = vrot.lane.b32.xlu0 %v621, 112
        %v790 = vpop.permute.xlu0 %789
        %791 = vrot.lane.b32.xlu0 %v628, 112
        %v792 = vpop.permute.xlu0 %791
        %793 = vrot.lane.b32.xlu0 %v635, 112
        %v794 = vpop.permute.xlu0 %793
        %795 = vrot.lane.b32.xlu0 %v642, 112
        %v796 = vpop.permute.xlu0 %795
        %797 = vrot.lane.b32.xlu0 %v649, 112
        %v798 = vpop.permute.xlu0 %797
        %799 = vrot.lane.b32.xlu0 %v656, 112
        %v800 = vpop.permute.xlu0 %799
        %801 = vrot.lane.b32.xlu0 %v663, 112
        %v802 = vpop.permute.xlu0 %801
        %803 = vrot.lane.b32.xlu0 %v670, 112
        %v804 = vpop.permute.xlu0 %803
        %805 = vrot.lane.b32.xlu0 %v677, 112
        %v806 = vpop.permute.xlu0 %805
        %807 = vrot.lane.b32.xlu0 %v684, 112
        %v808 = vpop.permute.xlu0 %807
        %809 = vrot.lane.b32.xlu0 %v691, 112
        %v810 = vpop.permute.xlu0 %809
        %811 = vrot.lane.b32.xlu0 %v698, 112
        %v812 = vpop.permute.xlu0 %811
        %813 = vrot.lane.b32.xlu0 %v705, 112
        %v814 = vpop.permute.xlu0 %813
        %815 = vrot.lane.b32.xlu0 %v712, 112
        %v816 = vpop.permute.xlu0 %815
        %817 = vrot.lane.b32.xlu0 %v719, 112
        %v818 = vpop.permute.xlu0 %817
        %vm835 = vsmask.f32 7938
        %vm836 = vmand %vm736, %vm835
        %v837 = vld [vmem:[#allocation2] sm:$0x1]
        %v838 = vsel %vm836, %v788, %v837
        %839 = vst [vmem:[#allocation2] sm:$0x1] %v838
        %v840 = vld [vmem:[#allocation2 + $0x8] sm:$0x1]
        %v841 = vsel %vm836, %v790, %v840
        %842 = vst [vmem:[#allocation2 + $0x8] sm:$0x1] %v841
        %v843 = vld [vmem:[#allocation2 + $0x10] sm:$0x1]
        %v844 = vsel %vm836, %v792, %v843
        %845 = vst [vmem:[#allocation2 + $0x10] sm:$0x1] %v844
        %v846 = vld [vmem:[#allocation2 + $0x18] sm:$0x1]
        %v847 = vsel %vm836, %v794, %v846
        %848 = vst [vmem:[#allocation2 + $0x18] sm:$0x1] %v847
        %v849 = vld [vmem:[#allocation2 + $0x20] sm:$0x1]
        %v850 = vsel %vm836, %v796, %v849
        %851 = vst [vmem:[#allocation2 + $0x20] sm:$0x1] %v850
        %v852 = vld [vmem:[#allocation2 + $0x28] sm:$0x1]
        %v853 = vsel %vm836, %v798, %v852
        %854 = vst [vmem:[#allocation2 + $0x28] sm:$0x1] %v853
        %v855 = vld [vmem:[#allocation2 + $0x30] sm:$0x1]
        %v856 = vsel %vm836, %v800, %v855
        %857 = vst [vmem:[#allocation2 + $0x30] sm:$0x1] %v856
        %v858 = vld [vmem:[#allocation2 + $0x38] sm:$0x1]
        %v859 = vsel %vm836, %v802, %v858
        %860 = vst [vmem:[#allocation2 + $0x38] sm:$0x1] %v859
        %v861 = vld [vmem:[#allocation2 + $0x40] sm:$0x1]
        %v862 = vsel %vm836, %v804, %v861
        %863 = vst [vmem:[#allocation2 + $0x40] sm:$0x1] %v862
        %v864 = vld [vmem:[#allocation2 + $0x48] sm:$0x1]
        %v865 = vsel %vm836, %v806, %v864
        %866 = vst [vmem:[#allocation2 + $0x48] sm:$0x1] %v865
        %v867 = vld [vmem:[#allocation2 + $0x50] sm:$0x1]
        %v868 = vsel %vm836, %v808, %v867
        %869 = vst [vmem:[#allocation2 + $0x50] sm:$0x1] %v868
        %v870 = vld [vmem:[#allocation2 + $0x58] sm:$0x1]
        %v871 = vsel %vm836, %v810, %v870
        %872 = vst [vmem:[#allocation2 + $0x58] sm:$0x1] %v871
        %v873 = vld [vmem:[#allocation2 + $0x60] sm:$0x1]
        %v874 = vsel %vm836, %v812, %v873
        %875 = vst [vmem:[#allocation2 + $0x60] sm:$0x1] %v874
        %v876 = vld [vmem:[#allocation2 + $0x68] sm:$0x1]
        %v877 = vsel %vm836, %v814, %v876
        %878 = vst [vmem:[#allocation2 + $0x68] sm:$0x1] %v877
        %v879 = vld [vmem:[#allocation2 + $0x70] sm:$0x1]
        %v880 = vsel %vm836, %v816, %v879
        %881 = vst [vmem:[#allocation2 + $0x70] sm:$0x1] %v880
        %v882 = vld [vmem:[#allocation2 + $0x78] sm:$0x1]
        %v883 = vsel %vm836, %v818, %v882
        %884 = vst [vmem:[#allocation2 + $0x78] sm:$0x1] %v883
        %885 = vrot.lane.b32.xlu0 %v614, 96
        %v886 = vpop.permute.xlu0 %885
        %887 = vrot.lane.b32.xlu0 %v621, 96
        %v888 = vpop.permute.xlu0 %887
        %889 = vrot.lane.b32.xlu0 %v628, 96
        %v890 = vpop.permute.xlu0 %889
        %891 = vrot.lane.b32.xlu0 %v635, 96
        %v892 = vpop.permute.xlu0 %891
        %893 = vrot.lane.b32.xlu0 %v642, 96
        %v894 = vpop.permute.xlu0 %893
        %895 = vrot.lane.b32.xlu0 %v649, 96
        %v896 = vpop.permute.xlu0 %895
        %897 = vrot.lane.b32.xlu0 %v656, 96
        %v898 = vpop.permute.xlu0 %897
        %899 = vrot.lane.b32.xlu0 %v663, 96
        %v900 = vpop.permute.xlu0 %899
        %901 = vrot.lane.b32.xlu0 %v670, 96
        %v902 = vpop.permute.xlu0 %901
        %903 = vrot.lane.b32.xlu0 %v677, 96
        %v904 = vpop.permute.xlu0 %903
        %905 = vrot.lane.b32.xlu0 %v684, 96
        %v906 = vpop.permute.xlu0 %905
        %907 = vrot.lane.b32.xlu0 %v691, 96
        %v908 = vpop.permute.xlu0 %907
        %909 = vrot.lane.b32.xlu0 %v698, 96
        %v910 = vpop.permute.xlu0 %909
        %911 = vrot.lane.b32.xlu0 %v705, 96
        %v912 = vpop.permute.xlu0 %911
        %913 = vrot.lane.b32.xlu0 %v712, 96
        %v914 = vpop.permute.xlu0 %913
        %915 = vrot.lane.b32.xlu0 %v719, 96
        %v916 = vpop.permute.xlu0 %915
        %vm933 = vcmask 123905
        %vm934 = vsmask.f32 1280
        %vm935 = vmand %vm933, %vm934
        %v936 = vld [vmem:[#allocation2] sm:$0x2]
        %v937 = vsel %vm935, %v886, %v936
        %938 = vst [vmem:[#allocation2] sm:$0x2] %v937
        %v939 = vld [vmem:[#allocation2 + $0x8] sm:$0x2]
        %v940 = vsel %vm935, %v888, %v939
        %941 = vst [vmem:[#allocation2 + $0x8] sm:$0x2] %v940
        %v942 = vld [vmem:[#allocation2 + $0x10] sm:$0x2]
        %v943 = vsel %vm935, %v890, %v942
        %944 = vst [vmem:[#allocation2 + $0x10] sm:$0x2] %v943
        %v945 = vld [vmem:[#allocation2 + $0x18] sm:$0x2]
        %v946 = vsel %vm935, %v892, %v945
        %947 = vst [vmem:[#allocation2 + $0x18] sm:$0x2] %v946
        %v948 = vld [vmem:[#allocation2 + $0x20] sm:$0x2]
        %v949 = vsel %vm935, %v894, %v948
        %950 = vst [vmem:[#allocation2 + $0x20] sm:$0x2] %v949
        %v951 = vld [vmem:[#allocation2 + $0x28] sm:$0x2]
        %v952 = vsel %vm935, %v896, %v951
        %953 = vst [vmem:[#allocation2 + $0x28] sm:$0x2] %v952
        %v954 = vld [vmem:[#allocation2 + $0x30] sm:$0x2]
        %v955 = vsel %vm935, %v898, %v954
        %956 = vst [vmem:[#allocation2 + $0x30] sm:$0x2] %v955
        %v957 = vld [vmem:[#allocation2 + $0x38] sm:$0x2]
        %v958 = vsel %vm935, %v900, %v957
        %959 = vst [vmem:[#allocation2 + $0x38] sm:$0x2] %v958
        %v960 = vld [vmem:[#allocation2 + $0x40] sm:$0x2]
        %v961 = vsel %vm935, %v902, %v960
        %962 = vst [vmem:[#allocation2 + $0x40] sm:$0x2] %v961
        %v963 = vld [vmem:[#allocation2 + $0x48] sm:$0x2]
        %v964 = vsel %vm935, %v904, %v963
        %965 = vst [vmem:[#allocation2 + $0x48] sm:$0x2] %v964
        %v966 = vld [vmem:[#allocation2 + $0x50] sm:$0x2]
        %v967 = vsel %vm935, %v906, %v966
        %968 = vst [vmem:[#allocation2 + $0x50] sm:$0x2] %v967
        %v969 = vld [vmem:[#allocation2 + $0x58] sm:$0x2]
        %v970 = vsel %vm935, %v908, %v969
        %971 = vst [vmem:[#allocation2 + $0x58] sm:$0x2] %v970
        %v972 = vld [vmem:[#allocation2 + $0x60] sm:$0x2]
        %v973 = vsel %vm935, %v910, %v972
        %974 = vst [vmem:[#allocation2 + $0x60] sm:$0x2] %v973
        %v975 = vld [vmem:[#allocation2 + $0x68] sm:$0x2]
        %v976 = vsel %vm935, %v912, %v975
        %977 = vst [vmem:[#allocation2 + $0x68] sm:$0x2] %v976
        %v978 = vld [vmem:[#allocation2 + $0x70] sm:$0x2]
        %v979 = vsel %vm935, %v914, %v978
        %980 = vst [vmem:[#allocation2 + $0x70] sm:$0x2] %v979
        %v981 = vld [vmem:[#allocation2 + $0x78] sm:$0x2]
        %v982 = vsel %vm935, %v916, %v981
        %983 = vst [vmem:[#allocation2 + $0x78] sm:$0x2] %v982
        %984 = vrot.lane.b32.xlu0 %v614, 80
        %v985 = vpop.permute.xlu0 %984
        %986 = vrot.lane.b32.xlu0 %v621, 80
        %v987 = vpop.permute.xlu0 %986
        %988 = vrot.lane.b32.xlu0 %v628, 80
        %v989 = vpop.permute.xlu0 %988
        %990 = vrot.lane.b32.xlu0 %v635, 80
        %v991 = vpop.permute.xlu0 %990
        %992 = vrot.lane.b32.xlu0 %v642, 80
        %v993 = vpop.permute.xlu0 %992
        %994 = vrot.lane.b32.xlu0 %v649, 80
        %v995 = vpop.permute.xlu0 %994
        %996 = vrot.lane.b32.xlu0 %v656, 80
        %v997 = vpop.permute.xlu0 %996
        %998 = vrot.lane.b32.xlu0 %v663, 80
        %v999 = vpop.permute.xlu0 %998
        %1000 = vrot.lane.b32.xlu0 %v670, 80
        %v1001 = vpop.permute.xlu0 %1000
        %1002 = vrot.lane.b32.xlu0 %v677, 80
        %v1003 = vpop.permute.xlu0 %1002
        %1004 = vrot.lane.b32.xlu0 %v684, 80
        %v1005 = vpop.permute.xlu0 %1004
        %1006 = vrot.lane.b32.xlu0 %v691, 80
        %v1007 = vpop.permute.xlu0 %1006
        %1008 = vrot.lane.b32.xlu0 %v698, 80
        %v1009 = vpop.permute.xlu0 %1008
        %1010 = vrot.lane.b32.xlu0 %v705, 80
        %v1011 = vpop.permute.xlu0 %1010
        %1012 = vrot.lane.b32.xlu0 %v712, 80
        %v1013 = vpop.permute.xlu0 %1012
        %1014 = vrot.lane.b32.xlu0 %v719, 80
        %v1015 = vpop.permute.xlu0 %1014
        %vm1032 = vsmask.f32 7942
        %vm1033 = vmand %vm933, %vm1032
        %v1034 = vld [vmem:[#allocation2] sm:$0x2]
        %v1035 = vsel %vm1033, %v985, %v1034
        %1036 = vst [vmem:[#allocation2] sm:$0x2] %v1035
        %v1037 = vld [vmem:[#allocation2 + $0x8] sm:$0x2]
        %v1038 = vsel %vm1033, %v987, %v1037
        %1039 = vst [vmem:[#allocation2 + $0x8] sm:$0x2] %v1038
        %v1040 = vld [vmem:[#allocation2 + $0x10] sm:$0x2]
        %v1041 = vsel %vm1033, %v989, %v1040
        %1042 = vst [vmem:[#allocation2 + $0x10] sm:$0x2] %v1041
        %v1043 = vld [vmem:[#allocation2 + $0x18] sm:$0x2]
        %v1044 = vsel %vm1033, %v991, %v1043
        %1045 = vst [vmem:[#allocation2 + $0x18] sm:$0x2] %v1044
        %v1046 = vld [vmem:[#allocation2 + $0x20] sm:$0x2]
        %v1047 = vsel %vm1033, %v993, %v1046
        %1048 = vst [vmem:[#allocation2 + $0x20] sm:$0x2] %v1047
        %v1049 = vld [vmem:[#allocation2 + $0x28] sm:$0x2]
        %v1050 = vsel %vm1033, %v995, %v1049
        %1051 = vst [vmem:[#allocation2 + $0x28] sm:$0x2] %v1050
        %v1052 = vld [vmem:[#allocation2 + $0x30] sm:$0x2]
        %v1053 = vsel %vm1033, %v997, %v1052
        %1054 = vst [vmem:[#allocation2 + $0x30] sm:$0x2] %v1053
        %v1055 = vld [vmem:[#allocation2 + $0x38] sm:$0x2]
        %v1056 = vsel %vm1033, %v999, %v1055
        %1057 = vst [vmem:[#allocation2 + $0x38] sm:$0x2] %v1056
        %v1058 = vld [vmem:[#allocation2 + $0x40] sm:$0x2]
        %v1059 = vsel %vm1033, %v1001, %v1058
        %1060 = vst [vmem:[#allocation2 + $0x40] sm:$0x2] %v1059
        %v1061 = vld [vmem:[#allocation2 + $0x48] sm:$0x2]
        %v1062 = vsel %vm1033, %v1003, %v1061
        %1063 = vst [vmem:[#allocation2 + $0x48] sm:$0x2] %v1062
        %v1064 = vld [vmem:[#allocation2 + $0x50] sm:$0x2]
        %v1065 = vsel %vm1033, %v1005, %v1064
        %1066 = vst [vmem:[#allocation2 + $0x50] sm:$0x2] %v1065
        %v1067 = vld [vmem:[#allocation2 + $0x58] sm:$0x2]
        %v1068 = vsel %vm1033, %v1007, %v1067
        %1069 = vst [vmem:[#allocation2 + $0x58] sm:$0x2] %v1068
        %v1070 = vld [vmem:[#allocation2 + $0x60] sm:$0x2]
        %v1071 = vsel %vm1033, %v1009, %v1070
        %1072 = vst [vmem:[#allocation2 + $0x60] sm:$0x2] %v1071
        %v1073 = vld [vmem:[#allocation2 + $0x68] sm:$0x2]
        %v1074 = vsel %vm1033, %v1011, %v1073
        %1075 = vst [vmem:[#allocation2 + $0x68] sm:$0x2] %v1074
        %v1076 = vld [vmem:[#allocation2 + $0x70] sm:$0x2]
        %v1077 = vsel %vm1033, %v1013, %v1076
        %1078 = vst [vmem:[#allocation2 + $0x70] sm:$0x2] %v1077
        %v1079 = vld [vmem:[#allocation2 + $0x78] sm:$0x2]
        %v1080 = vsel %vm1033, %v1015, %v1079
        %1081 = vst [vmem:[#allocation2 + $0x78] sm:$0x2] %v1080
        %1082 = vrot.lane.b32.xlu0 %v614, 64
        %v1083 = vpop.permute.xlu0 %1082
        %1084 = vrot.lane.b32.xlu0 %v621, 64
        %v1085 = vpop.permute.xlu0 %1084
        %1086 = vrot.lane.b32.xlu0 %v628, 64
        %v1087 = vpop.permute.xlu0 %1086
        %1088 = vrot.lane.b32.xlu0 %v635, 64
        %v1089 = vpop.permute.xlu0 %1088
        %1090 = vrot.lane.b32.xlu0 %v642, 64
        %v1091 = vpop.permute.xlu0 %1090
        %1092 = vrot.lane.b32.xlu0 %v649, 64
        %v1093 = vpop.permute.xlu0 %1092
        %1094 = vrot.lane.b32.xlu0 %v656, 64
        %v1095 = vpop.permute.xlu0 %1094
        %1096 = vrot.lane.b32.xlu0 %v663, 64
        %v1097 = vpop.permute.xlu0 %1096
        %1098 = vrot.lane.b32.xlu0 %v670, 64
        %v1099 = vpop.permute.xlu0 %1098
        %1100 = vrot.lane.b32.xlu0 %v677, 64
        %v1101 = vpop.permute.xlu0 %1100
        %1102 = vrot.lane.b32.xlu0 %v684, 64
        %v1103 = vpop.permute.xlu0 %1102
        %1104 = vrot.lane.b32.xlu0 %v691, 64
        %v1105 = vpop.permute.xlu0 %1104
        %1106 = vrot.lane.b32.xlu0 %v698, 64
        %v1107 = vpop.permute.xlu0 %1106
        %1108 = vrot.lane.b32.xlu0 %v705, 64
        %v1109 = vpop.permute.xlu0 %1108
        %1110 = vrot.lane.b32.xlu0 %v712, 64
        %v1111 = vpop.permute.xlu0 %1110
        %1112 = vrot.lane.b32.xlu0 %v719, 64
        %v1113 = vpop.permute.xlu0 %1112
        %vm1130 = vcmask 124930
        %vm1131 = vsmask.f32 2304
        %vm1132 = vmand %vm1130, %vm1131
        %v1133 = vld [vmem:[#allocation2] sm:$0x4]
        %v1134 = vsel %vm1132, %v1083, %v1133
        %1135 = vst [vmem:[#allocation2] sm:$0x4] %v1134
        %v1136 = vld [vmem:[#allocation2 + $0x8] sm:$0x4]
        %v1137 = vsel %vm1132, %v1085, %v1136
        %1138 = vst [vmem:[#allocation2 + $0x8] sm:$0x4] %v1137
        %v1139 = vld [vmem:[#allocation2 + $0x10] sm:$0x4]
        %v1140 = vsel %vm1132, %v1087, %v1139
        %1141 = vst [vmem:[#allocation2 + $0x10] sm:$0x4] %v1140
        %v1142 = vld [vmem:[#allocation2 + $0x18] sm:$0x4]
        %v1143 = vsel %vm1132, %v1089, %v1142
        %1144 = vst [vmem:[#allocation2 + $0x18] sm:$0x4] %v1143
        %v1145 = vld [vmem:[#allocation2 + $0x20] sm:$0x4]
        %v1146 = vsel %vm1132, %v1091, %v1145
        %1147 = vst [vmem:[#allocation2 + $0x20] sm:$0x4] %v1146
        %v1148 = vld [vmem:[#allocation2 + $0x28] sm:$0x4]
        %v1149 = vsel %vm1132, %v1093, %v1148
        %1150 = vst [vmem:[#allocation2 + $0x28] sm:$0x4] %v1149
        %v1151 = vld [vmem:[#allocation2 + $0x30] sm:$0x4]
        %v1152 = vsel %vm1132, %v1095, %v1151
        %1153 = vst [vmem:[#allocation2 + $0x30] sm:$0x4] %v1152
        %v1154 = vld [vmem:[#allocation2 + $0x38] sm:$0x4]
        %v1155 = vsel %vm1132, %v1097, %v1154
        %1156 = vst [vmem:[#allocation2 + $0x38] sm:$0x4] %v1155
        %v1157 = vld [vmem:[#allocation2 + $0x40] sm:$0x4]
        %v1158 = vsel %vm1132, %v1099, %v1157
        %1159 = vst [vmem:[#allocation2 + $0x40] sm:$0x4] %v1158
        %v1160 = vld [vmem:[#allocation2 + $0x48] sm:$0x4]
        %v1161 = vsel %vm1132, %v1101, %v1160
        %1162 = vst [vmem:[#allocation2 + $0x48] sm:$0x4] %v1161
        %v1163 = vld [vmem:[#allocation2 + $0x50] sm:$0x4]
        %v1164 = vsel %vm1132, %v1103, %v1163
        %1165 = vst [vmem:[#allocation2 + $0x50] sm:$0x4] %v1164
        %v1166 = vld [vmem:[#allocation2 + $0x58] sm:$0x4]
        %v1167 = vsel %vm1132, %v1105, %v1166
        %1168 = vst [vmem:[#allocation2 + $0x58] sm:$0x4] %v1167
        %v1169 = vld [vmem:[#allocation2 + $0x60] sm:$0x4]
        %v1170 = vsel %vm1132, %v1107, %v1169
        %1171 = vst [vmem:[#allocation2 + $0x60] sm:$0x4] %v1170
        %v1172 = vld [vmem:[#allocation2 + $0x68] sm:$0x4]
        %v1173 = vsel %vm1132, %v1109, %v1172
        %1174 = vst [vmem:[#allocation2 + $0x68] sm:$0x4] %v1173
        %v1175 = vld [vmem:[#allocation2 + $0x70] sm:$0x4]
        %v1176 = vsel %vm1132, %v1111, %v1175
        %1177 = vst [vmem:[#allocation2 + $0x70] sm:$0x4] %v1176
        %v1178 = vld [vmem:[#allocation2 + $0x78] sm:$0x4]
        %v1179 = vsel %vm1132, %v1113, %v1178
        %1180 = vst [vmem:[#allocation2 + $0x78] sm:$0x4] %v1179
        %1181 = vrot.lane.b32.xlu0 %v614, 48
        %v1182 = vpop.permute.xlu0 %1181
        %1183 = vrot.lane.b32.xlu0 %v621, 48
        %v1184 = vpop.permute.xlu0 %1183
        %1185 = vrot.lane.b32.xlu0 %v628, 48
        %v1186 = vpop.permute.xlu0 %1185
        %1187 = vrot.lane.b32.xlu0 %v635, 48
        %v1188 = vpop.permute.xlu0 %1187
        %1189 = vrot.lane.b32.xlu0 %v642, 48
        %v1190 = vpop.permute.xlu0 %1189
        %1191 = vrot.lane.b32.xlu0 %v649, 48
        %v1192 = vpop.permute.xlu0 %1191
        %1193 = vrot.lane.b32.xlu0 %v656, 48
        %v1194 = vpop.permute.xlu0 %1193
        %1195 = vrot.lane.b32.xlu0 %v663, 48
        %v1196 = vpop.permute.xlu0 %1195
        %1197 = vrot.lane.b32.xlu0 %v670, 48
        %v1198 = vpop.permute.xlu0 %1197
        %1199 = vrot.lane.b32.xlu0 %v677, 48
        %v1200 = vpop.permute.xlu0 %1199
        %1201 = vrot.lane.b32.xlu0 %v684, 48
        %v1202 = vpop.permute.xlu0 %1201
        %1203 = vrot.lane.b32.xlu0 %v691, 48
        %v1204 = vpop.permute.xlu0 %1203
        %1205 = vrot.lane.b32.xlu0 %v698, 48
        %v1206 = vpop.permute.xlu0 %1205
        %1207 = vrot.lane.b32.xlu0 %v705, 48
        %v1208 = vpop.permute.xlu0 %1207
        %1209 = vrot.lane.b32.xlu0 %v712, 48
        %v1210 = vpop.permute.xlu0 %1209
        %1211 = vrot.lane.b32.xlu0 %v719, 48
        %v1212 = vpop.permute.xlu0 %1211
        %vm1229 = vsmask.f32 7946
        %vm1230 = vmand %vm1130, %vm1229
        %v1231 = vld [vmem:[#allocation2] sm:$0x4]
        %v1232 = vsel %vm1230, %v1182, %v1231
        %1233 = vst [vmem:[#allocation2] sm:$0x4] %v1232
        %v1234 = vld [vmem:[#allocation2 + $0x8] sm:$0x4]
        %v1235 = vsel %vm1230, %v1184, %v1234
        %1236 = vst [vmem:[#allocation2 + $0x8] sm:$0x4] %v1235
        %v1237 = vld [vmem:[#allocation2 + $0x10] sm:$0x4]
        %v1238 = vsel %vm1230, %v1186, %v1237
        %1239 = vst [vmem:[#allocation2 + $0x10] sm:$0x4] %v1238
        %v1240 = vld [vmem:[#allocation2 + $0x18] sm:$0x4]
        %v1241 = vsel %vm1230, %v1188, %v1240
        %1242 = vst [vmem:[#allocation2 + $0x18] sm:$0x4] %v1241
        %v1243 = vld [vmem:[#allocation2 + $0x20] sm:$0x4]
        %v1244 = vsel %vm1230, %v1190, %v1243
        %1245 = vst [vmem:[#allocation2 + $0x20] sm:$0x4] %v1244
        %v1246 = vld [vmem:[#allocation2 + $0x28] sm:$0x4]
        %v1247 = vsel %vm1230, %v1192, %v1246
        %1248 = vst [vmem:[#allocation2 + $0x28] sm:$0x4] %v1247
        %v1249 = vld [vmem:[#allocation2 + $0x30] sm:$0x4]
        %v1250 = vsel %vm1230, %v1194, %v1249
        %1251 = vst [vmem:[#allocation2 + $0x30] sm:$0x4] %v1250
        %v1252 = vld [vmem:[#allocation2 + $0x38] sm:$0x4]
        %v1253 = vsel %vm1230, %v1196, %v1252
        %1254 = vst [vmem:[#allocation2 + $0x38] sm:$0x4] %v1253
        %v1255 = vld [vmem:[#allocation2 + $0x40] sm:$0x4]
        %v1256 = vsel %vm1230, %v1198, %v1255
        %1257 = vst [vmem:[#allocation2 + $0x40] sm:$0x4] %v1256
        %v1258 = vld [vmem:[#allocation2 + $0x48] sm:$0x4]
        %v1259 = vsel %vm1230, %v1200, %v1258
        %1260 = vst [vmem:[#allocation2 + $0x48] sm:$0x4] %v1259
        %v1261 = vld [vmem:[#allocation2 + $0x50] sm:$0x4]
        %v1262 = vsel %vm1230, %v1202, %v1261
        %1263 = vst [vmem:[#allocation2 + $0x50] sm:$0x4] %v1262
        %v1264 = vld [vmem:[#allocation2 + $0x58] sm:$0x4]
        %v1265 = vsel %vm1230, %v1204, %v1264
        %1266 = vst [vmem:[#allocation2 + $0x58] sm:$0x4] %v1265
        %v1267 = vld [vmem:[#allocation2 + $0x60] sm:$0x4]
        %v1268 = vsel %vm1230, %v1206, %v1267
        %1269 = vst [vmem:[#allocation2 + $0x60] sm:$0x4] %v1268
        %v1270 = vld [vmem:[#allocation2 + $0x68] sm:$0x4]
        %v1271 = vsel %vm1230, %v1208, %v1270
        %1272 = vst [vmem:[#allocation2 + $0x68] sm:$0x4] %v1271
        %v1273 = vld [vmem:[#allocation2 + $0x70] sm:$0x4]
        %v1274 = vsel %vm1230, %v1210, %v1273
        %1275 = vst [vmem:[#allocation2 + $0x70] sm:$0x4] %v1274
        %v1276 = vld [vmem:[#allocation2 + $0x78] sm:$0x4]
        %v1277 = vsel %vm1230, %v1212, %v1276
        %1278 = vst [vmem:[#allocation2 + $0x78] sm:$0x4] %v1277
        %1279 = vrot.lane.b32.xlu0 %v614, 32
        %v1280 = vpop.permute.xlu0 %1279
        %1281 = vrot.lane.b32.xlu0 %v621, 32
        %v1282 = vpop.permute.xlu0 %1281
        %1283 = vrot.lane.b32.xlu0 %v628, 32
        %v1284 = vpop.permute.xlu0 %1283
        %1285 = vrot.lane.b32.xlu0 %v635, 32
        %v1286 = vpop.permute.xlu0 %1285
        %1287 = vrot.lane.b32.xlu0 %v642, 32
        %v1288 = vpop.permute.xlu0 %1287
        %1289 = vrot.lane.b32.xlu0 %v649, 32
        %v1290 = vpop.permute.xlu0 %1289
        %1291 = vrot.lane.b32.xlu0 %v656, 32
        %v1292 = vpop.permute.xlu0 %1291
        %1293 = vrot.lane.b32.xlu0 %v663, 32
        %v1294 = vpop.permute.xlu0 %1293
        %1295 = vrot.lane.b32.xlu0 %v670, 32
        %v1296 = vpop.permute.xlu0 %1295
        %1297 = vrot.lane.b32.xlu0 %v677, 32
        %v1298 = vpop.permute.xlu0 %1297
        %1299 = vrot.lane.b32.xlu0 %v684, 32
        %v1300 = vpop.permute.xlu0 %1299
        %1301 = vrot.lane.b32.xlu0 %v691, 32
        %v1302 = vpop.permute.xlu0 %1301
        %1303 = vrot.lane.b32.xlu0 %v698, 32
        %v1304 = vpop.permute.xlu0 %1303
        %1305 = vrot.lane.b32.xlu0 %v705, 32
        %v1306 = vpop.permute.xlu0 %1305
        %1307 = vrot.lane.b32.xlu0 %v712, 32
        %v1308 = vpop.permute.xlu0 %1307
        %1309 = vrot.lane.b32.xlu0 %v719, 32
        %v1310 = vpop.permute.xlu0 %1309
        %vm1327 = vcmask 125955
        %vm1328 = vsmask.f32 3328
        %vm1329 = vmand %vm1327, %vm1328
        %v1330 = vld [vmem:[#allocation2] sm:$0x8]
        %v1331 = vsel %vm1329, %v1280, %v1330
        %1332 = vst [vmem:[#allocation2] sm:$0x8] %v1331
        %v1333 = vld [vmem:[#allocation2 + $0x8] sm:$0x8]
        %v1334 = vsel %vm1329, %v1282, %v1333
        %1335 = vst [vmem:[#allocation2 + $0x8] sm:$0x8] %v1334
        %v1336 = vld [vmem:[#allocation2 + $0x10] sm:$0x8]
        %v1337 = vsel %vm1329, %v1284, %v1336
        %1338 = vst [vmem:[#allocation2 + $0x10] sm:$0x8] %v1337
        %v1339 = vld [vmem:[#allocation2 + $0x18] sm:$0x8]
        %v1340 = vsel %vm1329, %v1286, %v1339
        %1341 = vst [vmem:[#allocation2 + $0x18] sm:$0x8] %v1340
        %v1342 = vld [vmem:[#allocation2 + $0x20] sm:$0x8]
        %v1343 = vsel %vm1329, %v1288, %v1342
        %1344 = vst [vmem:[#allocation2 + $0x20] sm:$0x8] %v1343
        %v1345 = vld [vmem:[#allocation2 + $0x28] sm:$0x8]
        %v1346 = vsel %vm1329, %v1290, %v1345
        %1347 = vst [vmem:[#allocation2 + $0x28] sm:$0x8] %v1346
        %v1348 = vld [vmem:[#allocation2 + $0x30] sm:$0x8]
        %v1349 = vsel %vm1329, %v1292, %v1348
        %1350 = vst [vmem:[#allocation2 + $0x30] sm:$0x8] %v1349
        %v1351 = vld [vmem:[#allocation2 + $0x38] sm:$0x8]
        %v1352 = vsel %vm1329, %v1294, %v1351
        %1353 = vst [vmem:[#allocation2 + $0x38] sm:$0x8] %v1352
        %v1354 = vld [vmem:[#allocation2 + $0x40] sm:$0x8]
        %v1355 = vsel %vm1329, %v1296, %v1354
        %1356 = vst [vmem:[#allocation2 + $0x40] sm:$0x8] %v1355
        %v1357 = vld [vmem:[#allocation2 + $0x48] sm:$0x8]
        %v1358 = vsel %vm1329, %v1298, %v1357
        %1359 = vst [vmem:[#allocation2 + $0x48] sm:$0x8] %v1358
        %v1360 = vld [vmem:[#allocation2 + $0x50] sm:$0x8]
        %v1361 = vsel %vm1329, %v1300, %v1360
        %1362 = vst [vmem:[#allocation2 + $0x50] sm:$0x8] %v1361
        %v1363 = vld [vmem:[#allocation2 + $0x58] sm:$0x8]
        %v1364 = vsel %vm1329, %v1302, %v1363
        %1365 = vst [vmem:[#allocation2 + $0x58] sm:$0x8] %v1364
        %v1366 = vld [vmem:[#allocation2 + $0x60] sm:$0x8]
        %v1367 = vsel %vm1329, %v1304, %v1366
        %1368 = vst [vmem:[#allocation2 + $0x60] sm:$0x8] %v1367
        %v1369 = vld [vmem:[#allocation2 + $0x68] sm:$0x8]
        %v1370 = vsel %vm1329, %v1306, %v1369
        %1371 = vst [vmem:[#allocation2 + $0x68] sm:$0x8] %v1370
        %v1372 = vld [vmem:[#allocation2 + $0x70] sm:$0x8]
        %v1373 = vsel %vm1329, %v1308, %v1372
        %1374 = vst [vmem:[#allocation2 + $0x70] sm:$0x8] %v1373
        %v1375 = vld [vmem:[#allocation2 + $0x78] sm:$0x8]
        %v1376 = vsel %vm1329, %v1310, %v1375
        %1377 = vst [vmem:[#allocation2 + $0x78] sm:$0x8] %v1376
        %1378 = vrot.lane.b32.xlu0 %v614, 16
        %v1379 = vpop.permute.xlu0 %1378
        %1380 = vrot.lane.b32.xlu0 %v621, 16
        %v1381 = vpop.permute.xlu0 %1380
        %1382 = vrot.lane.b32.xlu0 %v628, 16
        %v1383 = vpop.permute.xlu0 %1382
        %1384 = vrot.lane.b32.xlu0 %v635, 16
        %v1385 = vpop.permute.xlu0 %1384
        %1386 = vrot.lane.b32.xlu0 %v642, 16
        %v1387 = vpop.permute.xlu0 %1386
        %1388 = vrot.lane.b32.xlu0 %v649, 16
        %v1389 = vpop.permute.xlu0 %1388
        %1390 = vrot.lane.b32.xlu0 %v656, 16
        %v1391 = vpop.permute.xlu0 %1390
        %1392 = vrot.lane.b32.xlu0 %v663, 16
        %v1393 = vpop.permute.xlu0 %1392
        %1394 = vrot.lane.b32.xlu0 %v670, 16
        %v1395 = vpop.permute.xlu0 %1394
        %1396 = vrot.lane.b32.xlu0 %v677, 16
        %v1397 = vpop.permute.xlu0 %1396
        %1398 = vrot.lane.b32.xlu0 %v684, 16
        %v1399 = vpop.permute.xlu0 %1398
        %1400 = vrot.lane.b32.xlu0 %v691, 16
        %v1401 = vpop.permute.xlu0 %1400
        %1402 = vrot.lane.b32.xlu0 %v698, 16
        %v1403 = vpop.permute.xlu0 %1402
        %1404 = vrot.lane.b32.xlu0 %v705, 16
        %v1405 = vpop.permute.xlu0 %1404
        %1406 = vrot.lane.b32.xlu0 %v712, 16
        %v1407 = vpop.permute.xlu0 %1406
        %1408 = vrot.lane.b32.xlu0 %v719, 16
        %v1409 = vpop.permute.xlu0 %1408
        %vm1426 = vsmask.f32 7950
        %vm1427 = vmand %vm1327, %vm1426
        %v1428 = vld [vmem:[#allocation2] sm:$0x8]
        %v1429 = vsel %vm1427, %v1379, %v1428
        %1430 = vst [vmem:[#allocation2] sm:$0x8] %v1429
        %v1431 = vld [vmem:[#allocation2 + $0x8] sm:$0x8]
        %v1432 = vsel %vm1427, %v1381, %v1431
        %1433 = vst [vmem:[#allocation2 + $0x8] sm:$0x8] %v1432
        %v1434 = vld [vmem:[#allocation2 + $0x10] sm:$0x8]
        %v1435 = vsel %vm1427, %v1383, %v1434
        %1436 = vst [vmem:[#allocation2 + $0x10] sm:$0x8] %v1435
        %v1437 = vld [vmem:[#allocation2 + $0x18] sm:$0x8]
        %v1438 = vsel %vm1427, %v1385, %v1437
        %1439 = vst [vmem:[#allocation2 + $0x18] sm:$0x8] %v1438
        %v1440 = vld [vmem:[#allocation2 + $0x20] sm:$0x8]
        %v1441 = vsel %vm1427, %v1387, %v1440
        %1442 = vst [vmem:[#allocation2 + $0x20] sm:$0x8] %v1441
        %v1443 = vld [vmem:[#allocation2 + $0x28] sm:$0x8]
        %v1444 = vsel %vm1427, %v1389, %v1443
        %1445 = vst [vmem:[#allocation2 + $0x28] sm:$0x8] %v1444
        %v1446 = vld [vmem:[#allocation2 + $0x30] sm:$0x8]
        %v1447 = vsel %vm1427, %v1391, %v1446
        %1448 = vst [vmem:[#allocation2 + $0x30] sm:$0x8] %v1447
        %v1449 = vld [vmem:[#allocation2 + $0x38] sm:$0x8]
        %v1450 = vsel %vm1427, %v1393, %v1449
        %1451 = vst [vmem:[#allocation2 + $0x38] sm:$0x8] %v1450
        %v1452 = vld [vmem:[#allocation2 + $0x40] sm:$0x8]
        %v1453 = vsel %vm1427, %v1395, %v1452
        %1454 = vst [vmem:[#allocation2 + $0x40] sm:$0x8] %v1453
        %v1455 = vld [vmem:[#allocation2 + $0x48] sm:$0x8]
        %v1456 = vsel %vm1427, %v1397, %v1455
        %1457 = vst [vmem:[#allocation2 + $0x48] sm:$0x8] %v1456
        %v1458 = vld [vmem:[#allocation2 + $0x50] sm:$0x8]
        %v1459 = vsel %vm1427, %v1399, %v1458
        %1460 = vst [vmem:[#allocation2 + $0x50] sm:$0x8] %v1459
        %v1461 = vld [vmem:[#allocation2 + $0x58] sm:$0x8]
        %v1462 = vsel %vm1427, %v1401, %v1461
        %1463 = vst [vmem:[#allocation2 + $0x58] sm:$0x8] %v1462
        %v1464 = vld [vmem:[#allocation2 + $0x60] sm:$0x8]
        %v1465 = vsel %vm1427, %v1403, %v1464
        %1466 = vst [vmem:[#allocation2 + $0x60] sm:$0x8] %v1465
        %v1467 = vld [vmem:[#allocation2 + $0x68] sm:$0x8]
        %v1468 = vsel %vm1427, %v1405, %v1467
        %1469 = vst [vmem:[#allocation2 + $0x68] sm:$0x8] %v1468
        %v1470 = vld [vmem:[#allocation2 + $0x70] sm:$0x8]
        %v1471 = vsel %vm1427, %v1407, %v1470
        %1472 = vst [vmem:[#allocation2 + $0x70] sm:$0x8] %v1471
        %v1473 = vld [vmem:[#allocation2 + $0x78] sm:$0x8]
        %v1474 = vsel %vm1427, %v1409, %v1473
        %1475 = vst [vmem:[#allocation2 + $0x78] sm:$0x8] %v1474
        %v1477 = vcombine.high %v525, %v525
        %v1479 = vunpack.c.l.s4 1966171168
        %v1480 = vunpack.c.0.s8 %v1479
        %v1481 = vlaneseq
        %v1482 = vshrl.u32 %v1481, 7
        %v1483 = vsub.s32 %v1480, %v1482
        %v1484 = vrot.slane %v525, %v1483
        %v1486 = vunpack.c.l.s4 1966171168
        %v1487 = vunpack.c.0.s8 %v1486
        %v1488 = vlaneseq
        %v1489 = vshrl.u32 %v1488, 7
        %v1490 = vsub.s32 %v1487, %v1489
        %v1491 = vrot.slane %v1477, %v1490
        %v1492 = vcombine.high %v1484, %v1484
        %v1493 = vcombine.high %v1491, %v1491
        %v1495 = vunpack.c.l.s4 1966171168
        %v1496 = vunpack.c.0.s8 %v1495
        %v1497 = vlaneseq
        %v1498 = vshrl.u32 %v1497, 7
        %v1499 = vsub.s32 %v1496, %v1498
        %v1500 = vrot.slane %v1484, %v1499
        %v1502 = vunpack.c.l.s4 1966171168
        %v1503 = vunpack.c.0.s8 %v1502
        %v1504 = vlaneseq
        %v1505 = vshrl.u32 %v1504, 7
        %v1506 = vsub.s32 %v1503, %v1505
        %v1507 = vrot.slane %v1491, %v1506
        %v1509 = vunpack.c.l.s4 1966171168
        %v1510 = vunpack.c.0.s8 %v1509
        %v1511 = vlaneseq
        %v1512 = vshrl.u32 %v1511, 7
        %v1513 = vsub.s32 %v1510, %v1512
        %v1514 = vrot.slane %v1492, %v1513
        %v1516 = vunpack.c.l.s4 1966171168
        %v1517 = vunpack.c.0.s8 %v1516
        %v1518 = vlaneseq
        %v1519 = vshrl.u32 %v1518, 7
        %v1520 = vsub.s32 %v1517, %v1519
        %v1521 = vrot.slane %v1493, %v1520
        %v1522 = vcombine.high %v1500, %v1500
        %v1523 = vcombine.high %v1507, %v1507
        %v1524 = vcombine.high %v1514, %v1514
        %v1525 = vcombine.high %v1521, %v1521
        %v1526 = vunpack.i.l.s16 %v1500
        %v1527 = vunpack.i.h.s16 %v1500
        %v1528 = vunpack.i.l.s16 %v1514
        %v1529 = vunpack.i.h.s16 %v1514
        %v1530 = vunpack.i.l.s16 %v1522
        %v1531 = vunpack.i.h.s16 %v1522
        %v1532 = vunpack.i.l.s16 %v1524
        %v1533 = vunpack.i.h.s16 %v1524
        %v1534 = vunpack.i.l.s16 %v1507
        %v1535 = vunpack.i.h.s16 %v1507
        %v1536 = vunpack.i.l.s16 %v1521
        %v1537 = vunpack.i.h.s16 %v1521
        %v1538 = vunpack.i.l.s16 %v1523
        %v1539 = vunpack.i.h.s16 %v1523
        %v1540 = vunpack.i.l.s16 %v1525
        %v1541 = vunpack.i.h.s16 %v1525
        %v1542 = vpack.i.b16 %v1526, %v1526
        %v1543 = vpack.i.b16 %v1527, %v1527
        %v1544 = vpack.i.b16 %v1528, %v1528
        %v1545 = vpack.i.b16 %v1529, %v1529
        %v1546 = vpack.i.b16 %v1530, %v1530
        %v1547 = vpack.i.b16 %v1531, %v1531
        %v1548 = vpack.i.b16 %v1532, %v1532
        %v1549 = vpack.i.b16 %v1533, %v1533
        %v1550 = vpack.i.b16 %v1534, %v1534
        %v1551 = vpack.i.b16 %v1535, %v1535
        %v1552 = vpack.i.b16 %v1536, %v1536
        %v1553 = vpack.i.b16 %v1537, %v1537
        %v1554 = vpack.i.b16 %v1538, %v1538
        %v1555 = vpack.i.b16 %v1539, %v1539
        %v1556 = vpack.i.b16 %v1540, %v1540
        %v1557 = vpack.i.b16 %v1541, %v1541
        %v1559 = vunpack.c.l.s4 286326784
        %v1560 = vunpack.c.0.s8 %v1559
        %v1561 = vlaneseq
        %v1562 = vshrl.u32 %v1561, 7
        %v1563 = vsub.s32 %v1560, %v1562
        %v1564 = vrot.slane %v1542, %v1563
        %v1566 = vunpack.c.l.s4 286326784
        %v1567 = vunpack.c.0.s8 %v1566
        %v1568 = vlaneseq
        %v1569 = vshrl.u32 %v1568, 7
        %v1570 = vsub.s32 %v1567, %v1569
        %v1571 = vrot.slane %v1543, %v1570
        %v1573 = vunpack.c.l.s4 286326784
        %v1574 = vunpack.c.0.s8 %v1573
        %v1575 = vlaneseq
        %v1576 = vshrl.u32 %v1575, 7
        %v1577 = vsub.s32 %v1574, %v1576
        %v1578 = vrot.slane %v1544, %v1577
        %v1580 = vunpack.c.l.s4 286326784
        %v1581 = vunpack.c.0.s8 %v1580
        %v1582 = vlaneseq
        %v1583 = vshrl.u32 %v1582, 7
        %v1584 = vsub.s32 %v1581, %v1583
        %v1585 = vrot.slane %v1545, %v1584
        %v1587 = vunpack.c.l.s4 286326784
        %v1588 = vunpack.c.0.s8 %v1587
        %v1589 = vlaneseq
        %v1590 = vshrl.u32 %v1589, 7
        %v1591 = vsub.s32 %v1588, %v1590
        %v1592 = vrot.slane %v1546, %v1591
        %v1594 = vunpack.c.l.s4 286326784
        %v1595 = vunpack.c.0.s8 %v1594
        %v1596 = vlaneseq
        %v1597 = vshrl.u32 %v1596, 7
        %v1598 = vsub.s32 %v1595, %v1597
        %v1599 = vrot.slane %v1547, %v1598
        %v1601 = vunpack.c.l.s4 286326784
        %v1602 = vunpack.c.0.s8 %v1601
        %v1603 = vlaneseq
        %v1604 = vshrl.u32 %v1603, 7
        %v1605 = vsub.s32 %v1602, %v1604
        %v1606 = vrot.slane %v1548, %v1605
        %v1608 = vunpack.c.l.s4 286326784
        %v1609 = vunpack.c.0.s8 %v1608
        %v1610 = vlaneseq
        %v1611 = vshrl.u32 %v1610, 7
        %v1612 = vsub.s32 %v1609, %v1611
        %v1613 = vrot.slane %v1549, %v1612
        %v1615 = vunpack.c.l.s4 286326784
        %v1616 = vunpack.c.0.s8 %v1615
        %v1617 = vlaneseq
        %v1618 = vshrl.u32 %v1617, 7
        %v1619 = vsub.s32 %v1616, %v1618
        %v1620 = vrot.slane %v1550, %v1619
        %v1622 = vunpack.c.l.s4 286326784
        %v1623 = vunpack.c.0.s8 %v1622
        %v1624 = vlaneseq
        %v1625 = vshrl.u32 %v1624, 7
        %v1626 = vsub.s32 %v1623, %v1625
        %v1627 = vrot.slane %v1551, %v1626
        %v1629 = vunpack.c.l.s4 286326784
        %v1630 = vunpack.c.0.s8 %v1629
        %v1631 = vlaneseq
        %v1632 = vshrl.u32 %v1631, 7
        %v1633 = vsub.s32 %v1630, %v1632
        %v1634 = vrot.slane %v1552, %v1633
        %v1636 = vunpack.c.l.s4 286326784
        %v1637 = vunpack.c.0.s8 %v1636
        %v1638 = vlaneseq
        %v1639 = vshrl.u32 %v1638, 7
        %v1640 = vsub.s32 %v1637, %v1639
        %v1641 = vrot.slane %v1553, %v1640
        %v1643 = vunpack.c.l.s4 286326784
        %v1644 = vunpack.c.0.s8 %v1643
        %v1645 = vlaneseq
        %v1646 = vshrl.u32 %v1645, 7
        %v1647 = vsub.s32 %v1644, %v1646
        %v1648 = vrot.slane %v1554, %v1647
        %v1650 = vunpack.c.l.s4 286326784
        %v1651 = vunpack.c.0.s8 %v1650
        %v1652 = vlaneseq
        %v1653 = vshrl.u32 %v1652, 7
        %v1654 = vsub.s32 %v1651, %v1653
        %v1655 = vrot.slane %v1555, %v1654
        %v1657 = vunpack.c.l.s4 286326784
        %v1658 = vunpack.c.0.s8 %v1657
        %v1659 = vlaneseq
        %v1660 = vshrl.u32 %v1659, 7
        %v1661 = vsub.s32 %v1658, %v1660
        %v1662 = vrot.slane %v1556, %v1661
        %v1664 = vunpack.c.l.s4 286326784
        %v1665 = vunpack.c.0.s8 %v1664
        %v1666 = vlaneseq
        %v1667 = vshrl.u32 %v1666, 7
        %v1668 = vsub.s32 %v1665, %v1667
        %v1669 = vrot.slane %v1557, %v1668
        %v1686 = vld [vmem:[#allocation2 + $0x4] sm:$0x1]
        %v1687 = vsel %vm738, %v1564, %v1686
        %1688 = vst [vmem:[#allocation2 + $0x4] sm:$0x1] %v1687
        %v1689 = vld [vmem:[#allocation2 + $0xc] sm:$0x1]
        %v1690 = vsel %vm738, %v1571, %v1689
        %1691 = vst [vmem:[#allocation2 + $0xc] sm:$0x1] %v1690
        %v1692 = vld [vmem:[#allocation2 + $0x14] sm:$0x1]
        %v1693 = vsel %vm738, %v1578, %v1692
        %1694 = vst [vmem:[#allocation2 + $0x14] sm:$0x1] %v1693
        %v1695 = vld [vmem:[#allocation2 + $0x1c] sm:$0x1]
        %v1696 = vsel %vm738, %v1585, %v1695
        %1697 = vst [vmem:[#allocation2 + $0x1c] sm:$0x1] %v1696
        %v1698 = vld [vmem:[#allocation2 + $0x24] sm:$0x1]
        %v1699 = vsel %vm738, %v1592, %v1698
        %1700 = vst [vmem:[#allocation2 + $0x24] sm:$0x1] %v1699
        %v1701 = vld [vmem:[#allocation2 + $0x2c] sm:$0x1]
        %v1702 = vsel %vm738, %v1599, %v1701
        %1703 = vst [vmem:[#allocation2 + $0x2c] sm:$0x1] %v1702
        %v1704 = vld [vmem:[#allocation2 + $0x34] sm:$0x1]
        %v1705 = vsel %vm738, %v1606, %v1704
        %1706 = vst [vmem:[#allocation2 + $0x34] sm:$0x1] %v1705
        %v1707 = vld [vmem:[#allocation2 + $0x3c] sm:$0x1]
        %v1708 = vsel %vm738, %v1613, %v1707
        %1709 = vst [vmem:[#allocation2 + $0x3c] sm:$0x1] %v1708
        %v1710 = vld [vmem:[#allocation2 + $0x44] sm:$0x1]
        %v1711 = vsel %vm738, %v1620, %v1710
        %1712 = vst [vmem:[#allocation2 + $0x44] sm:$0x1] %v1711
        %v1713 = vld [vmem:[#allocation2 + $0x4c] sm:$0x1]
        %v1714 = vsel %vm738, %v1627, %v1713
        %1715 = vst [vmem:[#allocation2 + $0x4c] sm:$0x1] %v1714
        %v1716 = vld [vmem:[#allocation2 + $0x54] sm:$0x1]
        %v1717 = vsel %vm738, %v1634, %v1716
        %1718 = vst [vmem:[#allocation2 + $0x54] sm:$0x1] %v1717
        %v1719 = vld [vmem:[#allocation2 + $0x5c] sm:$0x1]
        %v1720 = vsel %vm738, %v1641, %v1719
        %1721 = vst [vmem:[#allocation2 + $0x5c] sm:$0x1] %v1720
        %v1722 = vld [vmem:[#allocation2 + $0x64] sm:$0x1]
        %v1723 = vsel %vm738, %v1648, %v1722
        %1724 = vst [vmem:[#allocation2 + $0x64] sm:$0x1] %v1723
        %v1725 = vld [vmem:[#allocation2 + $0x6c] sm:$0x1]
        %v1726 = vsel %vm738, %v1655, %v1725
        %1727 = vst [vmem:[#allocation2 + $0x6c] sm:$0x1] %v1726
        %v1728 = vld [vmem:[#allocation2 + $0x74] sm:$0x1]
        %v1729 = vsel %vm738, %v1662, %v1728
        %1730 = vst [vmem:[#allocation2 + $0x74] sm:$0x1] %v1729
        %v1731 = vld [vmem:[#allocation2 + $0x7c] sm:$0x1]
        %v1732 = vsel %vm738, %v1669, %v1731
        %1733 = vst [vmem:[#allocation2 + $0x7c] sm:$0x1] %v1732
        %1734 = vrot.lane.b32.xlu0 %v1564, 112
        %v1735 = vpop.permute.xlu0 %1734
        %1736 = vrot.lane.b32.xlu0 %v1571, 112
        %v1737 = vpop.permute.xlu0 %1736
        %1738 = vrot.lane.b32.xlu0 %v1578, 112
        %v1739 = vpop.permute.xlu0 %1738
        %1740 = vrot.lane.b32.xlu0 %v1585, 112
        %v1741 = vpop.permute.xlu0 %1740
        %1742 = vrot.lane.b32.xlu0 %v1592, 112
        %v1743 = vpop.permute.xlu0 %1742
        %1744 = vrot.lane.b32.xlu0 %v1599, 112
        %v1745 = vpop.permute.xlu0 %1744
        %1746 = vrot.lane.b32.xlu0 %v1606, 112
        %v1747 = vpop.permute.xlu0 %1746
        %1748 = vrot.lane.b32.xlu0 %v1613, 112
        %v1749 = vpop.permute.xlu0 %1748
        %1750 = vrot.lane.b32.xlu0 %v1620, 112
        %v1751 = vpop.permute.xlu0 %1750
        %1752 = vrot.lane.b32.xlu0 %v1627, 112
        %v1753 = vpop.permute.xlu0 %1752
        %1754 = vrot.lane.b32.xlu0 %v1634, 112
        %v1755 = vpop.permute.xlu0 %1754
        %1756 = vrot.lane.b32.xlu0 %v1641, 112
        %v1757 = vpop.permute.xlu0 %1756
        %1758 = vrot.lane.b32.xlu0 %v1648, 112
        %v1759 = vpop.permute.xlu0 %1758
        %1760 = vrot.lane.b32.xlu0 %v1655, 112
        %v1761 = vpop.permute.xlu0 %1760
        %1762 = vrot.lane.b32.xlu0 %v1662, 112
        %v1763 = vpop.permute.xlu0 %1762
        %1764 = vrot.lane.b32.xlu0 %v1669, 112
        %v1765 = vpop.permute.xlu0 %1764
        %v1782 = vld [vmem:[#allocation2 + $0x4] sm:$0x1]
        %v1783 = vsel %vm836, %v1735, %v1782
        %1784 = vst [vmem:[#allocation2 + $0x4] sm:$0x1] %v1783
        %v1785 = vld [vmem:[#allocation2 + $0xc] sm:$0x1]
        %v1786 = vsel %vm836, %v1737, %v1785
        %1787 = vst [vmem:[#allocation2 + $0xc] sm:$0x1] %v1786
        %v1788 = vld [vmem:[#allocation2 + $0x14] sm:$0x1]
        %v1789 = vsel %vm836, %v1739, %v1788
        %1790 = vst [vmem:[#allocation2 + $0x14] sm:$0x1] %v1789
        %v1791 = vld [vmem:[#allocation2 + $0x1c] sm:$0x1]
        %v1792 = vsel %vm836, %v1741, %v1791
        %1793 = vst [vmem:[#allocation2 + $0x1c] sm:$0x1] %v1792
        %v1794 = vld [vmem:[#allocation2 + $0x24] sm:$0x1]
        %v1795 = vsel %vm836, %v1743, %v1794
        %1796 = vst [vmem:[#allocation2 + $0x24] sm:$0x1] %v1795
        %v1797 = vld [vmem:[#allocation2 + $0x2c] sm:$0x1]
        %v1798 = vsel %vm836, %v1745, %v1797
        %1799 = vst [vmem:[#allocation2 + $0x2c] sm:$0x1] %v1798
        %v1800 = vld [vmem:[#allocation2 + $0x34] sm:$0x1]
        %v1801 = vsel %vm836, %v1747, %v1800
        %1802 = vst [vmem:[#allocation2 + $0x34] sm:$0x1] %v1801
        %v1803 = vld [vmem:[#allocation2 + $0x3c] sm:$0x1]
        %v1804 = vsel %vm836, %v1749, %v1803
        %1805 = vst [vmem:[#allocation2 + $0x3c] sm:$0x1] %v1804
        %v1806 = vld [vmem:[#allocation2 + $0x44] sm:$0x1]
        %v1807 = vsel %vm836, %v1751, %v1806
        %1808 = vst [vmem:[#allocation2 + $0x44] sm:$0x1] %v1807
        %v1809 = vld [vmem:[#allocation2 + $0x4c] sm:$0x1]
        %v1810 = vsel %vm836, %v1753, %v1809
        %1811 = vst [vmem:[#allocation2 + $0x4c] sm:$0x1] %v1810
        %v1812 = vld [vmem:[#allocation2 + $0x54] sm:$0x1]
        %v1813 = vsel %vm836, %v1755, %v1812
        %1814 = vst [vmem:[#allocation2 + $0x54] sm:$0x1] %v1813
        %v1815 = vld [vmem:[#allocation2 + $0x5c] sm:$0x1]
        %v1816 = vsel %vm836, %v1757, %v1815
        %1817 = vst [vmem:[#allocation2 + $0x5c] sm:$0x1] %v1816
        %v1818 = vld [vmem:[#allocation2 + $0x64] sm:$0x1]
        %v1819 = vsel %vm836, %v1759, %v1818
        %1820 = vst [vmem:[#allocation2 + $0x64] sm:$0x1] %v1819
        %v1821 = vld [vmem:[#allocation2 + $0x6c] sm:$0x1]
        %v1822 = vsel %vm836, %v1761, %v1821
        %1823 = vst [vmem:[#allocation2 + $0x6c] sm:$0x1] %v1822
        %v1824 = vld [vmem:[#allocation2 + $0x74] sm:$0x1]
        %v1825 = vsel %vm836, %v1763, %v1824
        %1826 = vst [vmem:[#allocation2 + $0x74] sm:$0x1] %v1825
        %v1827 = vld [vmem:[#allocation2 + $0x7c] sm:$0x1]
        %v1828 = vsel %vm836, %v1765, %v1827
        %1829 = vst [vmem:[#allocation2 + $0x7c] sm:$0x1] %v1828
        %1830 = vrot.lane.b32.xlu0 %v1564, 96
        %v1831 = vpop.permute.xlu0 %1830
        %1832 = vrot.lane.b32.xlu0 %v1571, 96
        %v1833 = vpop.permute.xlu0 %1832
        %1834 = vrot.lane.b32.xlu0 %v1578, 96
        %v1835 = vpop.permute.xlu0 %1834
        %1836 = vrot.lane.b32.xlu0 %v1585, 96
        %v1837 = vpop.permute.xlu0 %1836
        %1838 = vrot.lane.b32.xlu0 %v1592, 96
        %v1839 = vpop.permute.xlu0 %1838
        %1840 = vrot.lane.b32.xlu0 %v1599, 96
        %v1841 = vpop.permute.xlu0 %1840
        %1842 = vrot.lane.b32.xlu0 %v1606, 96
        %v1843 = vpop.permute.xlu0 %1842
        %1844 = vrot.lane.b32.xlu0 %v1613, 96
        %v1845 = vpop.permute.xlu0 %1844
        %1846 = vrot.lane.b32.xlu0 %v1620, 96
        %v1847 = vpop.permute.xlu0 %1846
        %1848 = vrot.lane.b32.xlu0 %v1627, 96
        %v1849 = vpop.permute.xlu0 %1848
        %1850 = vrot.lane.b32.xlu0 %v1634, 96
        %v1851 = vpop.permute.xlu0 %1850
        %1852 = vrot.lane.b32.xlu0 %v1641, 96
        %v1853 = vpop.permute.xlu0 %1852
        %1854 = vrot.lane.b32.xlu0 %v1648, 96
        %v1855 = vpop.permute.xlu0 %1854
        %1856 = vrot.lane.b32.xlu0 %v1655, 96
        %v1857 = vpop.permute.xlu0 %1856
        %1858 = vrot.lane.b32.xlu0 %v1662, 96
        %v1859 = vpop.permute.xlu0 %1858
        %1860 = vrot.lane.b32.xlu0 %v1669, 96
        %v1861 = vpop.permute.xlu0 %1860
        %v1878 = vld [vmem:[#allocation2 + $0x4] sm:$0x2]
        %v1879 = vsel %vm935, %v1831, %v1878
        %1880 = vst [vmem:[#allocation2 + $0x4] sm:$0x2] %v1879
        %v1881 = vld [vmem:[#allocation2 + $0xc] sm:$0x2]
        %v1882 = vsel %vm935, %v1833, %v1881
        %1883 = vst [vmem:[#allocation2 + $0xc] sm:$0x2] %v1882
        %v1884 = vld [vmem:[#allocation2 + $0x14] sm:$0x2]
        %v1885 = vsel %vm935, %v1835, %v1884
        %1886 = vst [vmem:[#allocation2 + $0x14] sm:$0x2] %v1885
        %v1887 = vld [vmem:[#allocation2 + $0x1c] sm:$0x2]
        %v1888 = vsel %vm935, %v1837, %v1887
        %1889 = vst [vmem:[#allocation2 + $0x1c] sm:$0x2] %v1888
        %v1890 = vld [vmem:[#allocation2 + $0x24] sm:$0x2]
        %v1891 = vsel %vm935, %v1839, %v1890
        %1892 = vst [vmem:[#allocation2 + $0x24] sm:$0x2] %v1891
        %v1893 = vld [vmem:[#allocation2 + $0x2c] sm:$0x2]
        %v1894 = vsel %vm935, %v1841, %v1893
        %1895 = vst [vmem:[#allocation2 + $0x2c] sm:$0x2] %v1894
        %v1896 = vld [vmem:[#allocation2 + $0x34] sm:$0x2]
        %v1897 = vsel %vm935, %v1843, %v1896
        %1898 = vst [vmem:[#allocation2 + $0x34] sm:$0x2] %v1897
        %v1899 = vld [vmem:[#allocation2 + $0x3c] sm:$0x2]
        %v1900 = vsel %vm935, %v1845, %v1899
        %1901 = vst [vmem:[#allocation2 + $0x3c] sm:$0x2] %v1900
        %v1902 = vld [vmem:[#allocation2 + $0x44] sm:$0x2]
        %v1903 = vsel %vm935, %v1847, %v1902
        %1904 = vst [vmem:[#allocation2 + $0x44] sm:$0x2] %v1903
        %v1905 = vld [vmem:[#allocation2 + $0x4c] sm:$0x2]
        %v1906 = vsel %vm935, %v1849, %v1905
        %1907 = vst [vmem:[#allocation2 + $0x4c] sm:$0x2] %v1906
        %v1908 = vld [vmem:[#allocation2 + $0x54] sm:$0x2]
        %v1909 = vsel %vm935, %v1851, %v1908
        %1910 = vst [vmem:[#allocation2 + $0x54] sm:$0x2] %v1909
        %v1911 = vld [vmem:[#allocation2 + $0x5c] sm:$0x2]
        %v1912 = vsel %vm935, %v1853, %v1911
        %1913 = vst [vmem:[#allocation2 + $0x5c] sm:$0x2] %v1912
        %v1914 = vld [vmem:[#allocation2 + $0x64] sm:$0x2]
        %v1915 = vsel %vm935, %v1855, %v1914
        %1916 = vst [vmem:[#allocation2 + $0x64] sm:$0x2] %v1915
        %v1917 = vld [vmem:[#allocation2 + $0x6c] sm:$0x2]
        %v1918 = vsel %vm935, %v1857, %v1917
        %1919 = vst [vmem:[#allocation2 + $0x6c] sm:$0x2] %v1918
        %v1920 = vld [vmem:[#allocation2 + $0x74] sm:$0x2]
        %v1921 = vsel %vm935, %v1859, %v1920
        %1922 = vst [vmem:[#allocation2 + $0x74] sm:$0x2] %v1921
        %v1923 = vld [vmem:[#allocation2 + $0x7c] sm:$0x2]
        %v1924 = vsel %vm935, %v1861, %v1923
        %1925 = vst [vmem:[#allocation2 + $0x7c] sm:$0x2] %v1924
        %1926 = vrot.lane.b32.xlu0 %v1564, 80
        %v1927 = vpop.permute.xlu0 %1926
        %1928 = vrot.lane.b32.xlu0 %v1571, 80
        %v1929 = vpop.permute.xlu0 %1928
        %1930 = vrot.lane.b32.xlu0 %v1578, 80
        %v1931 = vpop.permute.xlu0 %1930
        %1932 = vrot.lane.b32.xlu0 %v1585, 80
        %v1933 = vpop.permute.xlu0 %1932
        %1934 = vrot.lane.b32.xlu0 %v1592, 80
        %v1935 = vpop.permute.xlu0 %1934
        %1936 = vrot.lane.b32.xlu0 %v1599, 80
        %v1937 = vpop.permute.xlu0 %1936
        %1938 = vrot.lane.b32.xlu0 %v1606, 80
        %v1939 = vpop.permute.xlu0 %1938
        %1940 = vrot.lane.b32.xlu0 %v1613, 80
        %v1941 = vpop.permute.xlu0 %1940
        %1942 = vrot.lane.b32.xlu0 %v1620, 80
        %v1943 = vpop.permute.xlu0 %1942
        %1944 = vrot.lane.b32.xlu0 %v1627, 80
        %v1945 = vpop.permute.xlu0 %1944
        %1946 = vrot.lane.b32.xlu0 %v1634, 80
        %v1947 = vpop.permute.xlu0 %1946
        %1948 = vrot.lane.b32.xlu0 %v1641, 80
        %v1949 = vpop.permute.xlu0 %1948
        %1950 = vrot.lane.b32.xlu0 %v1648, 80
        %v1951 = vpop.permute.xlu0 %1950
        %1952 = vrot.lane.b32.xlu0 %v1655, 80
        %v1953 = vpop.permute.xlu0 %1952
        %1954 = vrot.lane.b32.xlu0 %v1662, 80
        %v1955 = vpop.permute.xlu0 %1954
        %1956 = vrot.lane.b32.xlu0 %v1669, 80
        %v1957 = vpop.permute.xlu0 %1956
        %v1974 = vld [vmem:[#allocation2 + $0x4] sm:$0x2]
        %v1975 = vsel %vm1033, %v1927, %v1974
        %1976 = vst [vmem:[#allocation2 + $0x4] sm:$0x2] %v1975
        %v1977 = vld [vmem:[#allocation2 + $0xc] sm:$0x2]
        %v1978 = vsel %vm1033, %v1929, %v1977
        %1979 = vst [vmem:[#allocation2 + $0xc] sm:$0x2] %v1978
        %v1980 = vld [vmem:[#allocation2 + $0x14] sm:$0x2]
        %v1981 = vsel %vm1033, %v1931, %v1980
        %1982 = vst [vmem:[#allocation2 + $0x14] sm:$0x2] %v1981
        %v1983 = vld [vmem:[#allocation2 + $0x1c] sm:$0x2]
        %v1984 = vsel %vm1033, %v1933, %v1983
        %1985 = vst [vmem:[#allocation2 + $0x1c] sm:$0x2] %v1984
        %v1986 = vld [vmem:[#allocation2 + $0x24] sm:$0x2]
        %v1987 = vsel %vm1033, %v1935, %v1986
        %1988 = vst [vmem:[#allocation2 + $0x24] sm:$0x2] %v1987
        %v1989 = vld [vmem:[#allocation2 + $0x2c] sm:$0x2]
        %v1990 = vsel %vm1033, %v1937, %v1989
        %1991 = vst [vmem:[#allocation2 + $0x2c] sm:$0x2] %v1990
        %v1992 = vld [vmem:[#allocation2 + $0x34] sm:$0x2]
        %v1993 = vsel %vm1033, %v1939, %v1992
        %1994 = vst [vmem:[#allocation2 + $0x34] sm:$0x2] %v1993
        %v1995 = vld [vmem:[#allocation2 + $0x3c] sm:$0x2]
        %v1996 = vsel %vm1033, %v1941, %v1995
        %1997 = vst [vmem:[#allocation2 + $0x3c] sm:$0x2] %v1996
        %v1998 = vld [vmem:[#allocation2 + $0x44] sm:$0x2]
        %v1999 = vsel %vm1033, %v1943, %v1998
        %2000 = vst [vmem:[#allocation2 + $0x44] sm:$0x2] %v1999
        %v2001 = vld [vmem:[#allocation2 + $0x4c] sm:$0x2]
        %v2002 = vsel %vm1033, %v1945, %v2001
        %2003 = vst [vmem:[#allocation2 + $0x4c] sm:$0x2] %v2002
        %v2004 = vld [vmem:[#allocation2 + $0x54] sm:$0x2]
        %v2005 = vsel %vm1033, %v1947, %v2004
        %2006 = vst [vmem:[#allocation2 + $0x54] sm:$0x2] %v2005
        %v2007 = vld [vmem:[#allocation2 + $0x5c] sm:$0x2]
        %v2008 = vsel %vm1033, %v1949, %v2007
        %2009 = vst [vmem:[#allocation2 + $0x5c] sm:$0x2] %v2008
        %v2010 = vld [vmem:[#allocation2 + $0x64] sm:$0x2]
        %v2011 = vsel %vm1033, %v1951, %v2010
        %2012 = vst [vmem:[#allocation2 + $0x64] sm:$0x2] %v2011
        %v2013 = vld [vmem:[#allocation2 + $0x6c] sm:$0x2]
        %v2014 = vsel %vm1033, %v1953, %v2013
        %2015 = vst [vmem:[#allocation2 + $0x6c] sm:$0x2] %v2014
        %v2016 = vld [vmem:[#allocation2 + $0x74] sm:$0x2]
        %v2017 = vsel %vm1033, %v1955, %v2016
        %2018 = vst [vmem:[#allocation2 + $0x74] sm:$0x2] %v2017
        %v2019 = vld [vmem:[#allocation2 + $0x7c] sm:$0x2]
        %v2020 = vsel %vm1033, %v1957, %v2019
        %2021 = vst [vmem:[#allocation2 + $0x7c] sm:$0x2] %v2020
        %2022 = vrot.lane.b32.xlu0 %v1564, 64
        %v2023 = vpop.permute.xlu0 %2022
        %2024 = vrot.lane.b32.xlu0 %v1571, 64
        %v2025 = vpop.permute.xlu0 %2024
        %2026 = vrot.lane.b32.xlu0 %v1578, 64
        %v2027 = vpop.permute.xlu0 %2026
        %2028 = vrot.lane.b32.xlu0 %v1585, 64
        %v2029 = vpop.permute.xlu0 %2028
        %2030 = vrot.lane.b32.xlu0 %v1592, 64
        %v2031 = vpop.permute.xlu0 %2030
        %2032 = vrot.lane.b32.xlu0 %v1599, 64
        %v2033 = vpop.permute.xlu0 %2032
        %2034 = vrot.lane.b32.xlu0 %v1606, 64
        %v2035 = vpop.permute.xlu0 %2034
        %2036 = vrot.lane.b32.xlu0 %v1613, 64
        %v2037 = vpop.permute.xlu0 %2036
        %2038 = vrot.lane.b32.xlu0 %v1620, 64
        %v2039 = vpop.permute.xlu0 %2038
        %2040 = vrot.lane.b32.xlu0 %v1627, 64
        %v2041 = vpop.permute.xlu0 %2040
        %2042 = vrot.lane.b32.xlu0 %v1634, 64
        %v2043 = vpop.permute.xlu0 %2042
        %2044 = vrot.lane.b32.xlu0 %v1641, 64
        %v2045 = vpop.permute.xlu0 %2044
        %2046 = vrot.lane.b32.xlu0 %v1648, 64
        %v2047 = vpop.permute.xlu0 %2046
        %2048 = vrot.lane.b32.xlu0 %v1655, 64
        %v2049 = vpop.permute.xlu0 %2048
        %2050 = vrot.lane.b32.xlu0 %v1662, 64
        %v2051 = vpop.permute.xlu0 %2050
        %2052 = vrot.lane.b32.xlu0 %v1669, 64
        %v2053 = vpop.permute.xlu0 %2052
        %v2070 = vld [vmem:[#allocation2 + $0x4] sm:$0x4]
        %v2071 = vsel %vm1132, %v2023, %v2070
        %2072 = vst [vmem:[#allocation2 + $0x4] sm:$0x4] %v2071
        %v2073 = vld [vmem:[#allocation2 + $0xc] sm:$0x4]
        %v2074 = vsel %vm1132, %v2025, %v2073
        %2075 = vst [vmem:[#allocation2 + $0xc] sm:$0x4] %v2074
        %v2076 = vld [vmem:[#allocation2 + $0x14] sm:$0x4]
        %v2077 = vsel %vm1132, %v2027, %v2076
        %2078 = vst [vmem:[#allocation2 + $0x14] sm:$0x4] %v2077
        %v2079 = vld [vmem:[#allocation2 + $0x1c] sm:$0x4]
        %v2080 = vsel %vm1132, %v2029, %v2079
        %2081 = vst [vmem:[#allocation2 + $0x1c] sm:$0x4] %v2080
        %v2082 = vld [vmem:[#allocation2 + $0x24] sm:$0x4]
        %v2083 = vsel %vm1132, %v2031, %v2082
        %2084 = vst [vmem:[#allocation2 + $0x24] sm:$0x4] %v2083
        %v2085 = vld [vmem:[#allocation2 + $0x2c] sm:$0x4]
        %v2086 = vsel %vm1132, %v2033, %v2085
        %2087 = vst [vmem:[#allocation2 + $0x2c] sm:$0x4] %v2086
        %v2088 = vld [vmem:[#allocation2 + $0x34] sm:$0x4]
        %v2089 = vsel %vm1132, %v2035, %v2088
        %2090 = vst [vmem:[#allocation2 + $0x34] sm:$0x4] %v2089
        %v2091 = vld [vmem:[#allocation2 + $0x3c] sm:$0x4]
        %v2092 = vsel %vm1132, %v2037, %v2091
        %2093 = vst [vmem:[#allocation2 + $0x3c] sm:$0x4] %v2092
        %v2094 = vld [vmem:[#allocation2 + $0x44] sm:$0x4]
        %v2095 = vsel %vm1132, %v2039, %v2094
        %2096 = vst [vmem:[#allocation2 + $0x44] sm:$0x4] %v2095
        %v2097 = vld [vmem:[#allocation2 + $0x4c] sm:$0x4]
        %v2098 = vsel %vm1132, %v2041, %v2097
        %2099 = vst [vmem:[#allocation2 + $0x4c] sm:$0x4] %v2098
        %v2100 = vld [vmem:[#allocation2 + $0x54] sm:$0x4]
        %v2101 = vsel %vm1132, %v2043, %v2100
        %2102 = vst [vmem:[#allocation2 + $0x54] sm:$0x4] %v2101
        %v2103 = vld [vmem:[#allocation2 + $0x5c] sm:$0x4]
        %v2104 = vsel %vm1132, %v2045, %v2103
        %2105 = vst [vmem:[#allocation2 + $0x5c] sm:$0x4] %v2104
        %v2106 = vld [vmem:[#allocation2 + $0x64] sm:$0x4]
        %v2107 = vsel %vm1132, %v2047, %v2106
        %2108 = vst [vmem:[#allocation2 + $0x64] sm:$0x4] %v2107
        %v2109 = vld [vmem:[#allocation2 + $0x6c] sm:$0x4]
        %v2110 = vsel %vm1132, %v2049, %v2109
        %2111 = vst [vmem:[#allocation2 + $0x6c] sm:$0x4] %v2110
        %v2112 = vld [vmem:[#allocation2 + $0x74] sm:$0x4]
        %v2113 = vsel %vm1132, %v2051, %v2112
        %2114 = vst [vmem:[#allocation2 + $0x74] sm:$0x4] %v2113
        %v2115 = vld [vmem:[#allocation2 + $0x7c] sm:$0x4]
        %v2116 = vsel %vm1132, %v2053, %v2115
        %2117 = vst [vmem:[#allocation2 + $0x7c] sm:$0x4] %v2116
        %2118 = vrot.lane.b32.xlu0 %v1564, 48
        %v2119 = vpop.permute.xlu0 %2118
        %2120 = vrot.lane.b32.xlu0 %v1571, 48
        %v2121 = vpop.permute.xlu0 %2120
        %2122 = vrot.lane.b32.xlu0 %v1578, 48
        %v2123 = vpop.permute.xlu0 %2122
        %2124 = vrot.lane.b32.xlu0 %v1585, 48
        %v2125 = vpop.permute.xlu0 %2124
        %2126 = vrot.lane.b32.xlu0 %v1592, 48
        %v2127 = vpop.permute.xlu0 %2126
        %2128 = vrot.lane.b32.xlu0 %v1599, 48
        %v2129 = vpop.permute.xlu0 %2128
        %2130 = vrot.lane.b32.xlu0 %v1606, 48
        %v2131 = vpop.permute.xlu0 %2130
        %2132 = vrot.lane.b32.xlu0 %v1613, 48
        %v2133 = vpop.permute.xlu0 %2132
        %2134 = vrot.lane.b32.xlu0 %v1620, 48
        %v2135 = vpop.permute.xlu0 %2134
        %2136 = vrot.lane.b32.xlu0 %v1627, 48
        %v2137 = vpop.permute.xlu0 %2136
        %2138 = vrot.lane.b32.xlu0 %v1634, 48
        %v2139 = vpop.permute.xlu0 %2138
        %2140 = vrot.lane.b32.xlu0 %v1641, 48
        %v2141 = vpop.permute.xlu0 %2140
        %2142 = vrot.lane.b32.xlu0 %v1648, 48
        %v2143 = vpop.permute.xlu0 %2142
        %2144 = vrot.lane.b32.xlu0 %v1655, 48
        %v2145 = vpop.permute.xlu0 %2144
        %2146 = vrot.lane.b32.xlu0 %v1662, 48
        %v2147 = vpop.permute.xlu0 %2146
        %2148 = vrot.lane.b32.xlu0 %v1669, 48
        %v2149 = vpop.permute.xlu0 %2148
        %v2166 = vld [vmem:[#allocation2 + $0x4] sm:$0x4]
        %v2167 = vsel %vm1230, %v2119, %v2166
        %2168 = vst [vmem:[#allocation2 + $0x4] sm:$0x4] %v2167
        %v2169 = vld [vmem:[#allocation2 + $0xc] sm:$0x4]
        %v2170 = vsel %vm1230, %v2121, %v2169
        %2171 = vst [vmem:[#allocation2 + $0xc] sm:$0x4] %v2170
        %v2172 = vld [vmem:[#allocation2 + $0x14] sm:$0x4]
        %v2173 = vsel %vm1230, %v2123, %v2172
        %2174 = vst [vmem:[#allocation2 + $0x14] sm:$0x4] %v2173
        %v2175 = vld [vmem:[#allocation2 + $0x1c] sm:$0x4]
        %v2176 = vsel %vm1230, %v2125, %v2175
        %2177 = vst [vmem:[#allocation2 + $0x1c] sm:$0x4] %v2176
        %v2178 = vld [vmem:[#allocation2 + $0x24] sm:$0x4]
        %v2179 = vsel %vm1230, %v2127, %v2178
        %2180 = vst [vmem:[#allocation2 + $0x24] sm:$0x4] %v2179
        %v2181 = vld [vmem:[#allocation2 + $0x2c] sm:$0x4]
        %v2182 = vsel %vm1230, %v2129, %v2181
        %2183 = vst [vmem:[#allocation2 + $0x2c] sm:$0x4] %v2182
        %v2184 = vld [vmem:[#allocation2 + $0x34] sm:$0x4]
        %v2185 = vsel %vm1230, %v2131, %v2184
        %2186 = vst [vmem:[#allocation2 + $0x34] sm:$0x4] %v2185
        %v2187 = vld [vmem:[#allocation2 + $0x3c] sm:$0x4]
        %v2188 = vsel %vm1230, %v2133, %v2187
        %2189 = vst [vmem:[#allocation2 + $0x3c] sm:$0x4] %v2188
        %v2190 = vld [vmem:[#allocation2 + $0x44] sm:$0x4]
        %v2191 = vsel %vm1230, %v2135, %v2190
        %2192 = vst [vmem:[#allocation2 + $0x44] sm:$0x4] %v2191
        %v2193 = vld [vmem:[#allocation2 + $0x4c] sm:$0x4]
        %v2194 = vsel %vm1230, %v2137, %v2193
        %2195 = vst [vmem:[#allocation2 + $0x4c] sm:$0x4] %v2194
        %v2196 = vld [vmem:[#allocation2 + $0x54] sm:$0x4]
        %v2197 = vsel %vm1230, %v2139, %v2196
        %2198 = vst [vmem:[#allocation2 + $0x54] sm:$0x4] %v2197
        %v2199 = vld [vmem:[#allocation2 + $0x5c] sm:$0x4]
        %v2200 = vsel %vm1230, %v2141, %v2199
        %2201 = vst [vmem:[#allocation2 + $0x5c] sm:$0x4] %v2200
        %v2202 = vld [vmem:[#allocation2 + $0x64] sm:$0x4]
        %v2203 = vsel %vm1230, %v2143, %v2202
        %2204 = vst [vmem:[#allocation2 + $0x64] sm:$0x4] %v2203
        %v2205 = vld [vmem:[#allocation2 + $0x6c] sm:$0x4]
        %v2206 = vsel %vm1230, %v2145, %v2205
        %2207 = vst [vmem:[#allocation2 + $0x6c] sm:$0x4] %v2206
        %v2208 = vld [vmem:[#allocation2 + $0x74] sm:$0x4]
        %v2209 = vsel %vm1230, %v2147, %v2208
        %2210 = vst [vmem:[#allocation2 + $0x74] sm:$0x4] %v2209
        %v2211 = vld [vmem:[#allocation2 + $0x7c] sm:$0x4]
        %v2212 = vsel %vm1230, %v2149, %v2211
        %2213 = vst [vmem:[#allocation2 + $0x7c] sm:$0x4] %v2212
        %2214 = vrot.lane.b32.xlu0 %v1564, 32
        %v2215 = vpop.permute.xlu0 %2214
        %2216 = vrot.lane.b32.xlu0 %v1571, 32
        %v2217 = vpop.permute.xlu0 %2216
        %2218 = vrot.lane.b32.xlu0 %v1578, 32
        %v2219 = vpop.permute.xlu0 %2218
        %2220 = vrot.lane.b32.xlu0 %v1585, 32
        %v2221 = vpop.permute.xlu0 %2220
        %2222 = vrot.lane.b32.xlu0 %v1592, 32
        %v2223 = vpop.permute.xlu0 %2222
        %2224 = vrot.lane.b32.xlu0 %v1599, 32
        %v2225 = vpop.permute.xlu0 %2224
        %2226 = vrot.lane.b32.xlu0 %v1606, 32
        %v2227 = vpop.permute.xlu0 %2226
        %2228 = vrot.lane.b32.xlu0 %v1613, 32
        %v2229 = vpop.permute.xlu0 %2228
        %2230 = vrot.lane.b32.xlu0 %v1620, 32
        %v2231 = vpop.permute.xlu0 %2230
        %2232 = vrot.lane.b32.xlu0 %v1627, 32
        %v2233 = vpop.permute.xlu0 %2232
        %2234 = vrot.lane.b32.xlu0 %v1634, 32
        %v2235 = vpop.permute.xlu0 %2234
        %2236 = vrot.lane.b32.xlu0 %v1641, 32
        %v2237 = vpop.permute.xlu0 %2236
        %2238 = vrot.lane.b32.xlu0 %v1648, 32
        %v2239 = vpop.permute.xlu0 %2238
        %2240 = vrot.lane.b32.xlu0 %v1655, 32
        %v2241 = vpop.permute.xlu0 %2240
        %2242 = vrot.lane.b32.xlu0 %v1662, 32
        %v2243 = vpop.permute.xlu0 %2242
        %2244 = vrot.lane.b32.xlu0 %v1669, 32
        %v2245 = vpop.permute.xlu0 %2244
        %v2262 = vld [vmem:[#allocation2 + $0x4] sm:$0x8]
        %v2263 = vsel %vm1329, %v2215, %v2262
        %2264 = vst [vmem:[#allocation2 + $0x4] sm:$0x8] %v2263
        %v2265 = vld [vmem:[#allocation2 + $0xc] sm:$0x8]
        %v2266 = vsel %vm1329, %v2217, %v2265
        %2267 = vst [vmem:[#allocation2 + $0xc] sm:$0x8] %v2266
        %v2268 = vld [vmem:[#allocation2 + $0x14] sm:$0x8]
        %v2269 = vsel %vm1329, %v2219, %v2268
        %2270 = vst [vmem:[#allocation2 + $0x14] sm:$0x8] %v2269
        %v2271 = vld [vmem:[#allocation2 + $0x1c] sm:$0x8]
        %v2272 = vsel %vm1329, %v2221, %v2271
        %2273 = vst [vmem:[#allocation2 + $0x1c] sm:$0x8] %v2272
        %v2274 = vld [vmem:[#allocation2 + $0x24] sm:$0x8]
        %v2275 = vsel %vm1329, %v2223, %v2274
        %2276 = vst [vmem:[#allocation2 + $0x24] sm:$0x8] %v2275
        %v2277 = vld [vmem:[#allocation2 + $0x2c] sm:$0x8]
        %v2278 = vsel %vm1329, %v2225, %v2277
        %2279 = vst [vmem:[#allocation2 + $0x2c] sm:$0x8] %v2278
        %v2280 = vld [vmem:[#allocation2 + $0x34] sm:$0x8]
        %v2281 = vsel %vm1329, %v2227, %v2280
        %2282 = vst [vmem:[#allocation2 + $0x34] sm:$0x8] %v2281
        %v2283 = vld [vmem:[#allocation2 + $0x3c] sm:$0x8]
        %v2284 = vsel %vm1329, %v2229, %v2283
        %2285 = vst [vmem:[#allocation2 + $0x3c] sm:$0x8] %v2284
        %v2286 = vld [vmem:[#allocation2 + $0x44] sm:$0x8]
        %v2287 = vsel %vm1329, %v2231, %v2286
        %2288 = vst [vmem:[#allocation2 + $0x44] sm:$0x8] %v2287
        %v2289 = vld [vmem:[#allocation2 + $0x4c] sm:$0x8]
        %v2290 = vsel %vm1329, %v2233, %v2289
        %2291 = vst [vmem:[#allocation2 + $0x4c] sm:$0x8] %v2290
        %v2292 = vld [vmem:[#allocation2 + $0x54] sm:$0x8]
        %v2293 = vsel %vm1329, %v2235, %v2292
        %2294 = vst [vmem:[#allocation2 + $0x54] sm:$0x8] %v2293
        %v2295 = vld [vmem:[#allocation2 + $0x5c] sm:$0x8]
        %v2296 = vsel %vm1329, %v2237, %v2295
        %2297 = vst [vmem:[#allocation2 + $0x5c] sm:$0x8] %v2296
        %v2298 = vld [vmem:[#allocation2 + $0x64] sm:$0x8]
        %v2299 = vsel %vm1329, %v2239, %v2298
        %2300 = vst [vmem:[#allocation2 + $0x64] sm:$0x8] %v2299
        %v2301 = vld [vmem:[#allocation2 + $0x6c] sm:$0x8]
        %v2302 = vsel %vm1329, %v2241, %v2301
        %2303 = vst [vmem:[#allocation2 + $0x6c] sm:$0x8] %v2302
        %v2304 = vld [vmem:[#allocation2 + $0x74] sm:$0x8]
        %v2305 = vsel %vm1329, %v2243, %v2304
        %2306 = vst [vmem:[#allocation2 + $0x74] sm:$0x8] %v2305
        %v2307 = vld [vmem:[#allocation2 + $0x7c] sm:$0x8]
        %v2308 = vsel %vm1329, %v2245, %v2307
        %2309 = vst [vmem:[#allocation2 + $0x7c] sm:$0x8] %v2308
        %2310 = vrot.lane.b32.xlu0 %v1564, 16
        %v2311 = vpop.permute.xlu0 %2310
        %2312 = vrot.lane.b32.xlu0 %v1571, 16
        %v2313 = vpop.permute.xlu0 %2312
        %2314 = vrot.lane.b32.xlu0 %v1578, 16
        %v2315 = vpop.permute.xlu0 %2314
        %2316 = vrot.lane.b32.xlu0 %v1585, 16
        %v2317 = vpop.permute.xlu0 %2316
        %2318 = vrot.lane.b32.xlu0 %v1592, 16
        %v2319 = vpop.permute.xlu0 %2318
        %2320 = vrot.lane.b32.xlu0 %v1599, 16
        %v2321 = vpop.permute.xlu0 %2320
        %2322 = vrot.lane.b32.xlu0 %v1606, 16
        %v2323 = vpop.permute.xlu0 %2322
        %2324 = vrot.lane.b32.xlu0 %v1613, 16
        %v2325 = vpop.permute.xlu0 %2324
        %2326 = vrot.lane.b32.xlu0 %v1620, 16
        %v2327 = vpop.permute.xlu0 %2326
        %2328 = vrot.lane.b32.xlu0 %v1627, 16
        %v2329 = vpop.permute.xlu0 %2328
        %2330 = vrot.lane.b32.xlu0 %v1634, 16
        %v2331 = vpop.permute.xlu0 %2330
        %2332 = vrot.lane.b32.xlu0 %v1641, 16
        %v2333 = vpop.permute.xlu0 %2332
        %2334 = vrot.lane.b32.xlu0 %v1648, 16
        %v2335 = vpop.permute.xlu0 %2334
        %2336 = vrot.lane.b32.xlu0 %v1655, 16
        %v2337 = vpop.permute.xlu0 %2336
        %2338 = vrot.lane.b32.xlu0 %v1662, 16
        %v2339 = vpop.permute.xlu0 %2338
        %2340 = vrot.lane.b32.xlu0 %v1669, 16
        %v2341 = vpop.permute.xlu0 %2340
        %v2358 = vld [vmem:[#allocation2 + $0x4] sm:$0x8]
        %v2359 = vsel %vm1427, %v2311, %v2358
        %2360 = vst [vmem:[#allocation2 + $0x4] sm:$0x8] %v2359
        %v2361 = vld [vmem:[#allocation2 + $0xc] sm:$0x8]
        %v2362 = vsel %vm1427, %v2313, %v2361
        %2363 = vst [vmem:[#allocation2 + $0xc] sm:$0x8] %v2362
        %v2364 = vld [vmem:[#allocation2 + $0x14] sm:$0x8]
        %v2365 = vsel %vm1427, %v2315, %v2364
        %2366 = vst [vmem:[#allocation2 + $0x14] sm:$0x8] %v2365
        %v2367 = vld [vmem:[#allocation2 + $0x1c] sm:$0x8]
        %v2368 = vsel %vm1427, %v2317, %v2367
        %2369 = vst [vmem:[#allocation2 + $0x1c] sm:$0x8] %v2368
        %v2370 = vld [vmem:[#allocation2 + $0x24] sm:$0x8]
        %v2371 = vsel %vm1427, %v2319, %v2370
        %2372 = vst [vmem:[#allocation2 + $0x24] sm:$0x8] %v2371
        %v2373 = vld [vmem:[#allocation2 + $0x2c] sm:$0x8]
        %v2374 = vsel %vm1427, %v2321, %v2373
        %2375 = vst [vmem:[#allocation2 + $0x2c] sm:$0x8] %v2374
        %v2376 = vld [vmem:[#allocation2 + $0x34] sm:$0x8]
        %v2377 = vsel %vm1427, %v2323, %v2376
        %2378 = vst [vmem:[#allocation2 + $0x34] sm:$0x8] %v2377
        %v2379 = vld [vmem:[#allocation2 + $0x3c] sm:$0x8]
        %v2380 = vsel %vm1427, %v2325, %v2379
        %2381 = vst [vmem:[#allocation2 + $0x3c] sm:$0x8] %v2380
        %v2382 = vld [vmem:[#allocation2 + $0x44] sm:$0x8]
        %v2383 = vsel %vm1427, %v2327, %v2382
        %2384 = vst [vmem:[#allocation2 + $0x44] sm:$0x8] %v2383
        %v2385 = vld [vmem:[#allocation2 + $0x4c] sm:$0x8]
        %v2386 = vsel %vm1427, %v2329, %v2385
        %2387 = vst [vmem:[#allocation2 + $0x4c] sm:$0x8] %v2386
        %v2388 = vld [vmem:[#allocation2 + $0x54] sm:$0x8]
        %v2389 = vsel %vm1427, %v2331, %v2388
        %2390 = vst [vmem:[#allocation2 + $0x54] sm:$0x8] %v2389
        %v2391 = vld [vmem:[#allocation2 + $0x5c] sm:$0x8]
        %v2392 = vsel %vm1427, %v2333, %v2391
        %2393 = vst [vmem:[#allocation2 + $0x5c] sm:$0x8] %v2392
        %v2394 = vld [vmem:[#allocation2 + $0x64] sm:$0x8]
        %v2395 = vsel %vm1427, %v2335, %v2394
        %2396 = vst [vmem:[#allocation2 + $0x64] sm:$0x8] %v2395
        %v2397 = vld [vmem:[#allocation2 + $0x6c] sm:$0x8]
        %v2398 = vsel %vm1427, %v2337, %v2397
        %2399 = vst [vmem:[#allocation2 + $0x6c] sm:$0x8] %v2398
        %v2400 = vld [vmem:[#allocation2 + $0x74] sm:$0x8]
        %v2401 = vsel %vm1427, %v2339, %v2400
        %2402 = vst [vmem:[#allocation2 + $0x74] sm:$0x8] %v2401
        %v2403 = vld [vmem:[#allocation2 + $0x7c] sm:$0x8]
        %v2404 = vsel %vm1427, %v2341, %v2403
        %2405 = vst [vmem:[#allocation2 + $0x7c] sm:$0x8] %v2404
        %v2406 = vld [vmem:[#allocation2] sm:$0xf]
        %v2407 = vld [vmem:[#allocation2 + $0x4] sm:$0xf]
        %v2408 = vld [vmem:[#allocation2 + $0x8] sm:$0xf]
        %v2409 = vld [vmem:[#allocation2 + $0xc] sm:$0xf]
        %v2410 = vld [vmem:[#allocation2 + $0x10] sm:$0xf]
        %v2411 = vld [vmem:[#allocation2 + $0x14] sm:$0xf]
        %v2412 = vld [vmem:[#allocation2 + $0x18] sm:$0xf]
        %v2413 = vld [vmem:[#allocation2 + $0x1c] sm:$0xf]
        %v2414 = vld [vmem:[#allocation2 + $0x20] sm:$0xf]
        %v2415 = vld [vmem:[#allocation2 + $0x24] sm:$0xf]
        %v2416 = vld [vmem:[#allocation2 + $0x28] sm:$0xf]
        %v2417 = vld [vmem:[#allocation2 + $0x2c] sm:$0xf]
        %v2418 = vld [vmem:[#allocation2 + $0x30] sm:$0xf]
        %v2419 = vld [vmem:[#allocation2 + $0x34] sm:$0xf]
        %v2420 = vld [vmem:[#allocation2 + $0x38] sm:$0xf]
        %v2421 = vld [vmem:[#allocation2 + $0x3c] sm:$0xf]
        %v2422 = vld [vmem:[#allocation2 + $0x40] sm:$0xf]
        %v2423 = vld [vmem:[#allocation2 + $0x44] sm:$0xf]
        %v2424 = vld [vmem:[#allocation2 + $0x48] sm:$0xf]
        %v2425 = vld [vmem:[#allocation2 + $0x4c] sm:$0xf]
        %v2426 = vld [vmem:[#allocation2 + $0x50] sm:$0xf]
        %v2427 = vld [vmem:[#allocation2 + $0x54] sm:$0xf]
        %v2428 = vld [vmem:[#allocation2 + $0x58] sm:$0xf]
        %v2429 = vld [vmem:[#allocation2 + $0x5c] sm:$0xf]
        %v2430 = vld [vmem:[#allocation2 + $0x60] sm:$0xf]
        %v2431 = vld [vmem:[#allocation2 + $0x64] sm:$0xf]
        %v2432 = vld [vmem:[#allocation2 + $0x68] sm:$0xf]
        %v2433 = vld [vmem:[#allocation2 + $0x6c] sm:$0xf]
        %v2434 = vld [vmem:[#allocation2 + $0x70] sm:$0xf]
        %v2435 = vld [vmem:[#allocation2 + $0x74] sm:$0xf]
        %v2436 = vld [vmem:[#allocation2 + $0x78] sm:$0xf]
        %v2437 = vld [vmem:[#allocation2 + $0x7c] sm:$0xf]
        %v2440 = vunpack.c.l.b16 %v2406
        %v2441 = vunpack.c.l.b16 %v2407
        %v2442 = vpack.c.b16 %v2441, %v2440
        %v2445 = vunpack.c.l.b16 %v2422
        %v2446 = vunpack.c.l.b16 %v2423
        %v2447 = vpack.c.b16 %v2446, %v2445
        %vm2448 = vcmask 130048
        %v2450 = vsel %vm2448, %v2442, 0
        %v2453 = vsel %vm2448, %v2447, 0
        %2455 = vmatprep.subr.bf16.mxu0 0
        %2456 = vmatpush1.bf16.xpose.msra.mxu0 0
        %2457 = vmatprep.subr.bf16.mxu0 0
        %2458 = vmatpush1.bf16.xpose.msra.mxu0 0
        %2459 = vmatprep.subr.bf16.mxu0 0
        %2460 = vmatpush1.bf16.xpose.msra.mxu0 0
        %2461 = vmatprep.subr.bf16.mxu0 0
        %2462 = vmatpush1.bf16.xpose.msra.mxu0 0
        %2463 = vmatprep.subr.bf16.mxu0 0
        %2464 = vmatpush1.bf16.xpose.msra.mxu0 0
        %2465 = vmatprep.subr.bf16.mxu0 0
        %2466 = vmatpush1.bf16.xpose.msra.mxu0 0
        %2467 = vmatprep.subr.bf16.mxu0 0
        %2468 = vmatpush1.bf16.xpose.msra.mxu0 0
        %2469 = vmatprep.subr.bf16.mxu0 0
        %2470 = vmatpush1.bf16.xpose.msra.mxu0 %v2453
        %2471 = vmatprep.subr.bf16.mxu0 0
        %2472 = vmatpush2.bf16.xpose.msra.mxu0 0
        %2473 = vmatprep.subr.bf16.mxu0 0
        %2474 = vmatpush2.bf16.xpose.msra.mxu0 0
        %2475 = vmatprep.subr.bf16.mxu0 0
        %2476 = vmatpush2.bf16.xpose.msra.mxu0 0
        %2477 = vmatprep.subr.bf16.mxu0 0
        %2478 = vmatpush2.bf16.xpose.msra.mxu0 0
        %2479 = vmatprep.subr.bf16.mxu0 0
        %2480 = vmatpush2.bf16.xpose.msra.mxu0 0
        %2481 = vmatprep.subr.bf16.mxu0 0
        %2482 = vmatpush2.bf16.xpose.msra.mxu0 0
        %2483 = vmatprep.subr.bf16.mxu0 0
        %2484 = vmatpush2.bf16.xpose.msra.mxu0 0
        %2485 = vmatprep.subr.bf16.mxu0 0
        %2486 = vmatpush2.bf16.xpose.msra.mxu0 0
        %2487 = vmatprep.mubr.bf16.mxu0 0
        %2488 = vmatmul.mubr.bf16.gmra.mxu0 %v2450
        %v2489 = vpop.f32.mrf.mxu0
        %v2490 = vadd.f32 0.0, %v2489
        %v2491 = vpop.f32.mrf.mxu0
        %v2492 = vpop.f32.mrf.mxu0
        %v2493 = vadd.f32 0.0, %v2492
        %v2494 = vpop.f32.mrf.mxu0
        %2495 = vdwg.mxu0
        %v2498 = vunpack.c.l.b16 %v2408
        %v2499 = vunpack.c.l.b16 %v2409
        %v2500 = vpack.c.b16 %v2499, %v2498
        %v2503 = vunpack.c.l.b16 %v2424
        %v2504 = vunpack.c.l.b16 %v2425
        %v2505 = vpack.c.b16 %v2504, %v2503
        %v2507 = vsel %vm2448, %v2500, 0
        %v2510 = vsel %vm2448, %v2505, 0
        %2512 = vmatprep.subr.bf16.mxu0 0
        %2513 = vmatpush1.bf16.xpose.msra.mxu0 0
        %2514 = vmatprep.subr.bf16.mxu0 0
        %2515 = vmatpush1.bf16.xpose.msra.mxu0 0
        %2516 = vmatprep.subr.bf16.mxu0 0
        %2517 = vmatpush1.bf16.xpose.msra.mxu0 0
        %2518 = vmatprep.subr.bf16.mxu0 0
        %2519 = vmatpush1.bf16.xpose.msra.mxu0 0
        %2520 = vmatprep.subr.bf16.mxu0 0
        %2521 = vmatpush1.bf16.xpose.msra.mxu0 0
        %2522 = vmatprep.subr.bf16.mxu0 0
        %2523 = vmatpush1.bf16.xpose.msra.mxu0 0
        %2524 = vmatprep.subr.bf16.mxu0 0
        %2525 = vmatpush1.bf16.xpose.msra.mxu0 0
        %2526 = vmatprep.subr.bf16.mxu0 0
        %2527 = vmatpush1.bf16.xpose.msra.mxu0 %v2510
        %2528 = vmatprep.subr.bf16.mxu0 0
        %2529 = vmatpush2.bf16.xpose.msra.mxu0 0
        %2530 = vmatprep.subr.bf16.mxu0 0
        %2531 = vmatpush2.bf16.xpose.msra.mxu0 0
        %2532 = vmatprep.subr.bf16.mxu0 0
        %2533 = vmatpush2.bf16.xpose.msra.mxu0 0
        %2534 = vmatprep.subr.bf16.mxu0 0
        %2535 = vmatpush2.bf16.xpose.msra.mxu0 0
        %2536 = vmatprep.subr.bf16.mxu0 0
        %2537 = vmatpush2.bf16.xpose.msra.mxu0 0
        %2538 = vmatprep.subr.bf16.mxu0 0
        %2539 = vmatpush2.bf16.xpose.msra.mxu0 0
        %2540 = vmatprep.subr.bf16.mxu0 0
        %2541 = vmatpush2.bf16.xpose.msra.mxu0 0
        %2542 = vmatprep.subr.bf16.mxu0 0
        %2543 = vmatpush2.bf16.xpose.msra.mxu0 0
        %2544 = vmatprep.mubr.bf16.mxu0 0
        %2545 = vmatmul.mubr.bf16.gmra.mxu0 %v2507
        %v2546 = vpop.f32.mrf.mxu0
        %v2547 = vadd.f32 0.0, %v2546
        %v2548 = vpop.f32.mrf.mxu0
        %v2549 = vpop.f32.mrf.mxu0
        %v2550 = vadd.f32 0.0, %v2549
        %v2551 = vpop.f32.mrf.mxu0
        %2552 = vdwg.mxu0
        %v2555 = vunpack.c.l.b16 %v2410
        %v2556 = vunpack.c.l.b16 %v2411
        %v2557 = vpack.c.b16 %v2556, %v2555
        %v2560 = vunpack.c.l.b16 %v2426
        %v2561 = vunpack.c.l.b16 %v2427
        %v2562 = vpack.c.b16 %v2561, %v2560
        %v2564 = vsel %vm2448, %v2557, 0
        %v2567 = vsel %vm2448, %v2562, 0
        %2569 = vmatprep.subr.bf16.mxu0 0
        %2570 = vmatpush1.bf16.xpose.msra.mxu0 0
        %2571 = vmatprep.subr.bf16.mxu0 0
        %2572 = vmatpush1.bf16.xpose.msra.mxu0 0
        %2573 = vmatprep.subr.bf16.mxu0 0
        %2574 = vmatpush1.bf16.xpose.msra.mxu0 0
        %2575 = vmatprep.subr.bf16.mxu0 0
        %2576 = vmatpush1.bf16.xpose.msra.mxu0 0
        %2577 = vmatprep.subr.bf16.mxu0 0
        %2578 = vmatpush1.bf16.xpose.msra.mxu0 0
        %2579 = vmatprep.subr.bf16.mxu0 0
        %2580 = vmatpush1.bf16.xpose.msra.mxu0 0
        %2581 = vmatprep.subr.bf16.mxu0 0
        %2582 = vmatpush1.bf16.xpose.msra.mxu0 0
        %2583 = vmatprep.subr.bf16.mxu0 0
        %2584 = vmatpush1.bf16.xpose.msra.mxu0 %v2567
        %2585 = vmatprep.subr.bf16.mxu0 0
        %2586 = vmatpush2.bf16.xpose.msra.mxu0 0
        %2587 = vmatprep.subr.bf16.mxu0 0
        %2588 = vmatpush2.bf16.xpose.msra.mxu0 0
        %2589 = vmatprep.subr.bf16.mxu0 0
        %2590 = vmatpush2.bf16.xpose.msra.mxu0 0
        %2591 = vmatprep.subr.bf16.mxu0 0
        %2592 = vmatpush2.bf16.xpose.msra.mxu0 0
        %2593 = vmatprep.subr.bf16.mxu0 0
        %2594 = vmatpush2.bf16.xpose.msra.mxu0 0
        %2595 = vmatprep.subr.bf16.mxu0 0
        %2596 = vmatpush2.bf16.xpose.msra.mxu0 0
        %2597 = vmatprep.subr.bf16.mxu0 0
        %2598 = vmatpush2.bf16.xpose.msra.mxu0 0
        %2599 = vmatprep.subr.bf16.mxu0 0
        %2600 = vmatpush2.bf16.xpose.msra.mxu0 0
        %2601 = vmatprep.mubr.bf16.mxu0 0
        %2602 = vmatmul.mubr.bf16.gmra.mxu0 %v2564
        %v2603 = vpop.f32.mrf.mxu0
        %v2604 = vadd.f32 0.0, %v2603
        %v2605 = vpop.f32.mrf.mxu0
        %v2606 = vpop.f32.mrf.mxu0
        %v2607 = vadd.f32 0.0, %v2606
        %v2608 = vpop.f32.mrf.mxu0
        %2609 = vdwg.mxu0
        %v2612 = vunpack.c.l.b16 %v2412
        %v2613 = vunpack.c.l.b16 %v2413
        %v2614 = vpack.c.b16 %v2613, %v2612
        %v2617 = vunpack.c.l.b16 %v2428
        %v2618 = vunpack.c.l.b16 %v2429
        %v2619 = vpack.c.b16 %v2618, %v2617
        %v2621 = vsel %vm2448, %v2614, 0
        %v2624 = vsel %vm2448, %v2619, 0
        %2626 = vmatprep.subr.bf16.mxu0 0
        %2627 = vmatpush1.bf16.xpose.msra.mxu0 0
        %2628 = vmatprep.subr.bf16.mxu0 0
        %2629 = vmatpush1.bf16.xpose.msra.mxu0 0
        %2630 = vmatprep.subr.bf16.mxu0 0
        %2631 = vmatpush1.bf16.xpose.msra.mxu0 0
        %2632 = vmatprep.subr.bf16.mxu0 0
        %2633 = vmatpush1.bf16.xpose.msra.mxu0 0
        %2634 = vmatprep.subr.bf16.mxu0 0
        %2635 = vmatpush1.bf16.xpose.msra.mxu0 0
        %2636 = vmatprep.subr.bf16.mxu0 0
        %2637 = vmatpush1.bf16.xpose.msra.mxu0 0
        %2638 = vmatprep.subr.bf16.mxu0 0
        %2639 = vmatpush1.bf16.xpose.msra.mxu0 0
        %2640 = vmatprep.subr.bf16.mxu0 0
        %2641 = vmatpush1.bf16.xpose.msra.mxu0 %v2624
        %2642 = vmatprep.subr.bf16.mxu0 0
        %2643 = vmatpush2.bf16.xpose.msra.mxu0 0
        %2644 = vmatprep.subr.bf16.mxu0 0
        %2645 = vmatpush2.bf16.xpose.msra.mxu0 0
        %2646 = vmatprep.subr.bf16.mxu0 0
        %2647 = vmatpush2.bf16.xpose.msra.mxu0 0
        %2648 = vmatprep.subr.bf16.mxu0 0
        %2649 = vmatpush2.bf16.xpose.msra.mxu0 0
        %2650 = vmatprep.subr.bf16.mxu0 0
        %2651 = vmatpush2.bf16.xpose.msra.mxu0 0
        %2652 = vmatprep.subr.bf16.mxu0 0
        %2653 = vmatpush2.bf16.xpose.msra.mxu0 0
        %2654 = vmatprep.subr.bf16.mxu0 0
        %2655 = vmatpush2.bf16.xpose.msra.mxu0 0
        %2656 = vmatprep.subr.bf16.mxu0 0
        %2657 = vmatpush2.bf16.xpose.msra.mxu0 0
        %2658 = vmatprep.mubr.bf16.mxu0 0
        %2659 = vmatmul.mubr.bf16.gmra.mxu0 %v2621
        %v2660 = vpop.f32.mrf.mxu0
        %v2661 = vadd.f32 0.0, %v2660
        %v2662 = vpop.f32.mrf.mxu0
        %v2663 = vpop.f32.mrf.mxu0
        %v2664 = vadd.f32 0.0, %v2663
        %v2665 = vpop.f32.mrf.mxu0
        %2666 = vdwg.mxu0
        %v2669 = vunpack.c.l.b16 %v2414
        %v2670 = vunpack.c.l.b16 %v2415
        %v2671 = vpack.c.b16 %v2670, %v2669
        %v2674 = vunpack.c.l.b16 %v2430
        %v2675 = vunpack.c.l.b16 %v2431
        %v2676 = vpack.c.b16 %v2675, %v2674
        %v2678 = vsel %vm2448, %v2671, 0
        %v2681 = vsel %vm2448, %v2676, 0
        %2683 = vmatprep.subr.bf16.mxu0 0
        %2684 = vmatpush1.bf16.xpose.msra.mxu0 0
        %2685 = vmatprep.subr.bf16.mxu0 0
        %2686 = vmatpush1.bf16.xpose.msra.mxu0 0
        %2687 = vmatprep.subr.bf16.mxu0 0
        %2688 = vmatpush1.bf16.xpose.msra.mxu0 0
        %2689 = vmatprep.subr.bf16.mxu0 0
        %2690 = vmatpush1.bf16.xpose.msra.mxu0 0
        %2691 = vmatprep.subr.bf16.mxu0 0
        %2692 = vmatpush1.bf16.xpose.msra.mxu0 0
        %2693 = vmatprep.subr.bf16.mxu0 0
        %2694 = vmatpush1.bf16.xpose.msra.mxu0 0
        %2695 = vmatprep.subr.bf16.mxu0 0
        %2696 = vmatpush1.bf16.xpose.msra.mxu0 0
        %2697 = vmatprep.subr.bf16.mxu0 0
        %2698 = vmatpush1.bf16.xpose.msra.mxu0 %v2681
        %2699 = vmatprep.subr.bf16.mxu0 0
        %2700 = vmatpush2.bf16.xpose.msra.mxu0 0
        %2701 = vmatprep.subr.bf16.mxu0 0
        %2702 = vmatpush2.bf16.xpose.msra.mxu0 0
        %2703 = vmatprep.subr.bf16.mxu0 0
        %2704 = vmatpush2.bf16.xpose.msra.mxu0 0
        %2705 = vmatprep.subr.bf16.mxu0 0
        %2706 = vmatpush2.bf16.xpose.msra.mxu0 0
        %2707 = vmatprep.subr.bf16.mxu0 0
        %2708 = vmatpush2.bf16.xpose.msra.mxu0 0
        %2709 = vmatprep.subr.bf16.mxu0 0
        %2710 = vmatpush2.bf16.xpose.msra.mxu0 0
        %2711 = vmatprep.subr.bf16.mxu0 0
        %2712 = vmatpush2.bf16.xpose.msra.mxu0 0
        %2713 = vmatprep.subr.bf16.mxu0 0
        %2714 = vmatpush2.bf16.xpose.msra.mxu0 0
        %2715 = vmatprep.mubr.bf16.mxu0 0
        %2716 = vmatmul.mubr.bf16.gmra.mxu0 %v2678
        %v2717 = vpop.f32.mrf.mxu0
        %v2718 = vadd.f32 0.0, %v2717
        %v2719 = vpop.f32.mrf.mxu0
        %v2720 = vpop.f32.mrf.mxu0
        %v2721 = vadd.f32 0.0, %v2720
        %v2722 = vpop.f32.mrf.mxu0
        %2723 = vdwg.mxu0
        %v2726 = vunpack.c.l.b16 %v2416
        %v2727 = vunpack.c.l.b16 %v2417
        %v2728 = vpack.c.b16 %v2727, %v2726
        %v2731 = vunpack.c.l.b16 %v2432
        %v2732 = vunpack.c.l.b16 %v2433
        %v2733 = vpack.c.b16 %v2732, %v2731
        %v2735 = vsel %vm2448, %v2728, 0
        %v2738 = vsel %vm2448, %v2733, 0
        %2740 = vmatprep.subr.bf16.mxu0 0
        %2741 = vmatpush1.bf16.xpose.msra.mxu0 0
        %2742 = vmatprep.subr.bf16.mxu0 0
        %2743 = vmatpush1.bf16.xpose.msra.mxu0 0
        %2744 = vmatprep.subr.bf16.mxu0 0
        %2745 = vmatpush1.bf16.xpose.msra.mxu0 0
        %2746 = vmatprep.subr.bf16.mxu0 0
        %2747 = vmatpush1.bf16.xpose.msra.mxu0 0
        %2748 = vmatprep.subr.bf16.mxu0 0
        %2749 = vmatpush1.bf16.xpose.msra.mxu0 0
        %2750 = vmatprep.subr.bf16.mxu0 0
        %2751 = vmatpush1.bf16.xpose.msra.mxu0 0
        %2752 = vmatprep.subr.bf16.mxu0 0
        %2753 = vmatpush1.bf16.xpose.msra.mxu0 0
        %2754 = vmatprep.subr.bf16.mxu0 0
        %2755 = vmatpush1.bf16.xpose.msra.mxu0 %v2738
        %2756 = vmatprep.subr.bf16.mxu0 0
        %2757 = vmatpush2.bf16.xpose.msra.mxu0 0
        %2758 = vmatprep.subr.bf16.mxu0 0
        %2759 = vmatpush2.bf16.xpose.msra.mxu0 0
        %2760 = vmatprep.subr.bf16.mxu0 0
        %2761 = vmatpush2.bf16.xpose.msra.mxu0 0
        %2762 = vmatprep.subr.bf16.mxu0 0
        %2763 = vmatpush2.bf16.xpose.msra.mxu0 0
        %2764 = vmatprep.subr.bf16.mxu0 0
        %2765 = vmatpush2.bf16.xpose.msra.mxu0 0
        %2766 = vmatprep.subr.bf16.mxu0 0
        %2767 = vmatpush2.bf16.xpose.msra.mxu0 0
        %2768 = vmatprep.subr.bf16.mxu0 0
        %2769 = vmatpush2.bf16.xpose.msra.mxu0 0
        %2770 = vmatprep.subr.bf16.mxu0 0
        %2771 = vmatpush2.bf16.xpose.msra.mxu0 0
        %2772 = vmatprep.mubr.bf16.mxu0 0
        %2773 = vmatmul.mubr.bf16.gmra.mxu0 %v2735
        %v2774 = vpop.f32.mrf.mxu0
        %v2775 = vadd.f32 0.0, %v2774
        %v2776 = vpop.f32.mrf.mxu0
        %v2777 = vpop.f32.mrf.mxu0
        %v2778 = vadd.f32 0.0, %v2777
        %v2779 = vpop.f32.mrf.mxu0
        %2780 = vdwg.mxu0
        %v2783 = vunpack.c.l.b16 %v2418
        %v2784 = vunpack.c.l.b16 %v2419
        %v2785 = vpack.c.b16 %v2784, %v2783
        %v2788 = vunpack.c.l.b16 %v2434
        %v2789 = vunpack.c.l.b16 %v2435
        %v2790 = vpack.c.b16 %v2789, %v2788
        %v2792 = vsel %vm2448, %v2785, 0
        %v2795 = vsel %vm2448, %v2790, 0
        %2797 = vmatprep.subr.bf16.mxu0 0
        %2798 = vmatpush1.bf16.xpose.msra.mxu0 0
        %2799 = vmatprep.subr.bf16.mxu0 0
        %2800 = vmatpush1.bf16.xpose.msra.mxu0 0
        %2801 = vmatprep.subr.bf16.mxu0 0
        %2802 = vmatpush1.bf16.xpose.msra.mxu0 0
        %2803 = vmatprep.subr.bf16.mxu0 0
        %2804 = vmatpush1.bf16.xpose.msra.mxu0 0
        %2805 = vmatprep.subr.bf16.mxu0 0
        %2806 = vmatpush1.bf16.xpose.msra.mxu0 0
        %2807 = vmatprep.subr.bf16.mxu0 0
        %2808 = vmatpush1.bf16.xpose.msra.mxu0 0
        %2809 = vmatprep.subr.bf16.mxu0 0
        %2810 = vmatpush1.bf16.xpose.msra.mxu0 0
        %2811 = vmatprep.subr.bf16.mxu0 0
        %2812 = vmatpush1.bf16.xpose.msra.mxu0 %v2795
        %2813 = vmatprep.subr.bf16.mxu0 0
        %2814 = vmatpush2.bf16.xpose.msra.mxu0 0
        %2815 = vmatprep.subr.bf16.mxu0 0
        %2816 = vmatpush2.bf16.xpose.msra.mxu0 0
        %2817 = vmatprep.subr.bf16.mxu0 0
        %2818 = vmatpush2.bf16.xpose.msra.mxu0 0
        %2819 = vmatprep.subr.bf16.mxu0 0
        %2820 = vmatpush2.bf16.xpose.msra.mxu0 0
        %2821 = vmatprep.subr.bf16.mxu0 0
        %2822 = vmatpush2.bf16.xpose.msra.mxu0 0
        %2823 = vmatprep.subr.bf16.mxu0 0
        %2824 = vmatpush2.bf16.xpose.msra.mxu0 0
        %2825 = vmatprep.subr.bf16.mxu0 0
        %2826 = vmatpush2.bf16.xpose.msra.mxu0 0
        %2827 = vmatprep.subr.bf16.mxu0 0
        %2828 = vmatpush2.bf16.xpose.msra.mxu0 0
        %2829 = vmatprep.mubr.bf16.mxu0 0
        %2830 = vmatmul.mubr.bf16.gmra.mxu0 %v2792
        %v2831 = vpop.f32.mrf.mxu0
        %v2832 = vadd.f32 0.0, %v2831
        %v2833 = vpop.f32.mrf.mxu0
        %v2834 = vpop.f32.mrf.mxu0
        %v2835 = vadd.f32 0.0, %v2834
        %v2836 = vpop.f32.mrf.mxu0
        %2837 = vdwg.mxu0
        %v2840 = vunpack.c.l.b16 %v2420
        %v2841 = vunpack.c.l.b16 %v2421
        %v2842 = vpack.c.b16 %v2841, %v2840
        %v2845 = vunpack.c.l.b16 %v2436
        %v2846 = vunpack.c.l.b16 %v2437
        %v2847 = vpack.c.b16 %v2846, %v2845
        %v2849 = vsel %vm2448, %v2842, 0
        %v2852 = vsel %vm2448, %v2847, 0
        %2854 = vmatprep.subr.bf16.mxu0 0
        %2855 = vmatpush1.bf16.xpose.msra.mxu0 0
        %2856 = vmatprep.subr.bf16.mxu0 0
        %2857 = vmatpush1.bf16.xpose.msra.mxu0 0
        %2858 = vmatprep.subr.bf16.mxu0 0
        %2859 = vmatpush1.bf16.xpose.msra.mxu0 0
        %2860 = vmatprep.subr.bf16.mxu0 0
        %2861 = vmatpush1.bf16.xpose.msra.mxu0 0
        %2862 = vmatprep.subr.bf16.mxu0 0
        %2863 = vmatpush1.bf16.xpose.msra.mxu0 0
        %2864 = vmatprep.subr.bf16.mxu0 0
        %2865 = vmatpush1.bf16.xpose.msra.mxu0 0
        %2866 = vmatprep.subr.bf16.mxu0 0
        %2867 = vmatpush1.bf16.xpose.msra.mxu0 0
        %2868 = vmatprep.subr.bf16.mxu0 0
        %2869 = vmatpush1.bf16.xpose.msra.mxu0 %v2852
        %2870 = vmatprep.subr.bf16.mxu0 0
        %2871 = vmatpush2.bf16.xpose.msra.mxu0 0
        %2872 = vmatprep.subr.bf16.mxu0 0
        %2873 = vmatpush2.bf16.xpose.msra.mxu0 0
        %2874 = vmatprep.subr.bf16.mxu0 0
        %2875 = vmatpush2.bf16.xpose.msra.mxu0 0
        %2876 = vmatprep.subr.bf16.mxu0 0
        %2877 = vmatpush2.bf16.xpose.msra.mxu0 0
        %2878 = vmatprep.subr.bf16.mxu0 0
        %2879 = vmatpush2.bf16.xpose.msra.mxu0 0
        %2880 = vmatprep.subr.bf16.mxu0 0
        %2881 = vmatpush2.bf16.xpose.msra.mxu0 0
        %2882 = vmatprep.subr.bf16.mxu0 0
        %2883 = vmatpush2.bf16.xpose.msra.mxu0 0
        %2884 = vmatprep.subr.bf16.mxu0 0
        %2885 = vmatpush2.bf16.xpose.msra.mxu0 0
        %2886 = vmatprep.mubr.bf16.mxu0 0
        %2887 = vmatmul.mubr.bf16.gmra.mxu0 %v2849
        %v2888 = vpop.f32.mrf.mxu0
        %v2889 = vadd.f32 0.0, %v2888
        %v2890 = vpop.f32.mrf.mxu0
        %v2891 = vpop.f32.mrf.mxu0
        %v2892 = vadd.f32 0.0, %v2891
        %v2893 = vpop.f32.mrf.mxu0
        %2894 = vdwg.mxu0
        %2895 = vst.msk [vmem:[%s207] sm:$0xff] %vm2448, %v2490
        %2896 = vst.msk [vmem:[%s207 + $0x8] sm:$0xff] %vm2448, %v2493
        %2897 = vst.msk [vmem:[%s207 + $0x10] sm:$0xff] %vm2448, %v2547
        %2898 = vst.msk [vmem:[%s207 + $0x18] sm:$0xff] %vm2448, %v2550
        %2899 = vst.msk [vmem:[%s207 + $0x20] sm:$0xff] %vm2448, %v2604
        %2900 = vst.msk [vmem:[%s207 + $0x28] sm:$0xff] %vm2448, %v2607
        %2901 = vst.msk [vmem:[%s207 + $0x30] sm:$0xff] %vm2448, %v2661
        %2902 = vst.msk [vmem:[%s207 + $0x38] sm:$0xff] %vm2448, %v2664
        %2903 = vst.msk [vmem:[%s207 + $0x40] sm:$0xff] %vm2448, %v2718
        %2904 = vst.msk [vmem:[%s207 + $0x48] sm:$0xff] %vm2448, %v2721
        %2905 = vst.msk [vmem:[%s207 + $0x50] sm:$0xff] %vm2448, %v2775
        %2906 = vst.msk [vmem:[%s207 + $0x58] sm:$0xff] %vm2448, %v2778
        %2907 = vst.msk [vmem:[%s207 + $0x60] sm:$0xff] %vm2448, %v2832
        %2908 = vst.msk [vmem:[%s207 + $0x68] sm:$0xff] %vm2448, %v2835
        %2909 = vst.msk [vmem:[%s207 + $0x70] sm:$0xff] %vm2448, %v2889
        %2910 = vst.msk [vmem:[%s207 + $0x78] sm:$0xff] %vm2448, %v2892
        %s2911 = sand.u32 %s120, 1
        %s2912 = scalar_lea.sflag [#allocation4], %s2911
        %s2913 = sand.u32 %s120, 1
        %s2914 = smul.addr %s2913, 128
        %s2915 = scalar_lea.vmem [#allocation3], %s2914
        // Predicated region
        $region37: #{tpu_custom_call.1} parent=35 // pred_check
          %p2916 = pneg %p130
        $region38: #{tpu_custom_call.1} parent=35 // pred_check_branch
          %2918 = sbr.rel (%p2916) target = $region40
        $region39: #{tpu_custom_call.1} parent=35 // pred_region
          %s2919 = smul.u32 8, %s18
          %s2921 = ssub.s32 2048, 2048
          %2922 = vsyncadd %s2912, %s2921
          %s2923 = smul.addr %s2919, 2
          %s2924 = smul.addr %s2923, 128
          %s2925 = scalar_lea.hbm %s4, %s2924
          %s2926 = sshll.u32 %s2915, 4
          %s2927 = int_to_ptr.vmem [resolvable:$true] %s2926
          %2932 = dma.vmem_to_hbm [thread:$0]  %s2927, 2048, %s2925, %s2912, 128, 128, 8
        $region40: #{tpu_custom_call.1} parent=35 // pred_fallthru
          _
      $region36: #{tpu_custom_call.1} parent=5 // pred_fallthru
        _
      %p2933 = scmp.le.s32.totalorder 2, %s13
      // Predicated region
      $region41: #{tpu_custom_call.1} parent=5 // pred_check
        %p2934 = pneg %p2933
      $region42: #{tpu_custom_call.1} parent=5 // pred_check_branch
        %2936 = sbr.rel (%p2934) target = $region44
      $region43: #{tpu_custom_call.1} parent=5 // pred_region
        %s2937 = ssub.s32 %s13, 2
        // Predicated region
        $region45: #{tpu_custom_call.1} parent=43 // pred_check
          %p2938 = pneg %p136
        $region46: #{tpu_custom_call.1} parent=43 // pred_check_branch
          %2940 = sbr.rel (%p2938) target = $region48
        $region47: #{tpu_custom_call.1} parent=43 // pred_region
          %s2941 = sand.u32 %s121, 1
          %s2942 = scalar_lea.sflag [#allocation4], %s2941
          %s2943 = sand.u32 %s121, 1
          %s2944 = smul.addr %s2943, 128
          %s2945 = scalar_lea.vmem [#allocation3], %s2944
          %2946 = dma.done %s2942, 2048
        $region48: #{tpu_custom_call.1} parent=43 // pred_fallthru
          _
      $region44: #{tpu_custom_call.1} parent=5 // pred_fallthru
        _
    $region6: #{tpu_custom_call.1} parent=1 // loop_footer
      %s17 = sadd.s32 1, %s13
    $region7: #{tpu_custom_call.1} parent=1 // loop_footer_branch
      %12 = sbr.rel target = $region3
    $region8: #{tpu_custom_call.1} parent=1 // loop_exit
      _
    %2947 = vsyncpa [#allocation4], 1
    %s2948 = scalar_lea.sflag [#allocation4], 1
    %2949 = vsyncpa %s2948, 1

</llo_original>
